<compile_context>
chip_gen: v6e
topology: v6e:2x2x1
jax: 0.10.0
libtpu: 0.0.40
codegen_flags: <defaults>
</compile_context>

<pallas_src>
import functools
import math

import jax
import jax.numpy as jnp
from jax import lax
from jax.experimental import pallas as pl
from jax.experimental.pallas import tpu as pltpu

LN_EPS = 1e-5


def _round_up(n, m):
    return ((n + m - 1) // m) * m


def _gelu_exact(x):
    # Exact GELU as used by nn.GELU() (approximate='none').
    return 0.5 * x * (1.0 + lax.erf(x * (1.0 / math.sqrt(2.0))))


def _layernorm(v, w, b, d_true, lane_mask, *, input_zero_padded):
    """LayerNorm over the last (lane) axis with optional lane padding.

    `w`/`b` are (1, Dp) with zeros in padded lanes, so padded output lanes are 0.
    If `input_zero_padded`, the padded lanes of `v` are known to be exactly zero
    and the value-masking `where` is skipped (mean is already correct).
    """
    inv_d = 1.0 / float(d_true)
    vm = v
    if (lane_mask is not None) and (not input_zero_padded):
        vm = jnp.where(lane_mask, v, 0.0)
    mu = jnp.sum(vm, axis=-1, keepdims=True) * inv_d
    diff = v - mu
    if lane_mask is not None:
        diff = jnp.where(lane_mask, diff, 0.0)
    var = jnp.sum(diff * diff, axis=-1, keepdims=True) * inv_d
    return diff * lax.rsqrt(var + LN_EPS) * w + b


def mixer_block_kernel(
    x_ref,
    ln1w_ref, ln1b_ref,                    # (1, Dp) token-mixer LayerNorm
    tw1t_ref, tb1_ref, tw2t_ref, tb2_ref,  # (Hsp,Sp),(Hsp,1),(Sp,Hsp),(Sp,1) token MLP
    ln2w_ref, ln2b_ref,                    # (1, Dp) channel-mixer LayerNorm
    cw1_ref, cb1_ref, cw2_ref, cb2_ref,    # (Dp,Hdp),(1,Hdp),(Hdp,Dp),(1,Dp) channel MLP
    o_ref,                                 # (bt, Sp, Dp) output block
    x1_ref,                                # (bt, Sp, Dp) f32 VMEM scratch slab
    *, d_true, mm_dtype, gelu_dtype,
):
    f32 = jnp.float32
    bt, sp, dp = x_ref.shape
    x = x_ref[...].astype(f32)                                   # (bt, Sp, Dp)

    lane_mask = None
    if dp != d_true:
        lane_mask = lax.broadcasted_iota(jnp.int32, (1, dp), 1) < d_true

    # ---------------- token mixer (LN over D, MLP over S) ----------------
    # Input lane padding is known zero -> skip the value-masking where.
    xn = _layernorm(x, ln1w_ref[...], ln1b_ref[...], d_true,
                    lane_mask, input_zero_padded=True)           # (bt, Sp, Dp)
    tw1t = tw1t_ref[...]
    tb1 = tb1_ref[...]
    tw2t = tw2t_ref[...]
    tb2 = tb2_ref[...]
    # Static per-batch loop: independent 2D-matmul chains; results written into
    # the VMEM scratch slab (no Python-list / jnp.concatenate copy).
    for b in range(bt):
        h = jnp.dot(tw1t, xn[b].astype(mm_dtype),
                    preferred_element_type=f32) + tb1            # (Hsp, Dp) f32
        h = _gelu_exact(h.astype(gelu_dtype)).astype(mm_dtype)
        y = jnp.dot(tw2t, h, preferred_element_type=f32) + tb2   # (Sp, Dp) f32
        x1_ref[b] = x[b] + y                                     # residual

    # ---------------- channel mixer on the flattened (bt*Sp, Dp) slab ----
    x1 = x1_ref[...].reshape(bt * sp, dp)                        # free reshape (Sp % 8 == 0)
    # x1's padded lanes carry garbage (token bias broadcast) -> masked LN.
    xn2 = _layernorm(x1, ln2w_ref[...], ln2b_ref[...], d_true,
                     lane_mask, input_zero_padded=False)
    h2 = jnp.dot(xn2.astype(mm_dtype), cw1_ref[...],
                 preferred_element_type=f32) + cb1_ref[...]      # (bt*Sp, Hdp)
    h2 = _gelu_exact(h2.astype(gelu_dtype)).astype(mm_dtype)
    y2 = jnp.dot(h2, cw2_ref[...],
                 preferred_element_type=f32) + cb2_ref[...]      # (bt*Sp, Dp)

    o_ref[...] = (x1 + y2).reshape(bt, sp, dp).astype(o_ref.dtype)


def _vmem_budget_bytes():
    """Generation-aware scoped-VMEM budget (conservative default = v7x per-TC)."""
    cap = None
    try:
        cap = int(pltpu.get_tpu_info().vmem_capacity_bytes)
    except Exception:
        cap = None
    if not cap:
        cap = 64 * 1024 * 1024
    return min(int(cap * 0.7), 100 * 1024 * 1024)


def _vmem_estimate(bt, Sp, Dp, Hsp, Hdp, param_bytes, x_itemsize):
    xblk = bt * Sp * Dp
    est = 4 * xblk * x_itemsize            # double-buffered in + out blocks
    est += 6 * xblk * 4                    # x/xn/x1-scratch/xn2/y2/out staging (f32)
    est += bt * Hsp * Dp * 4               # token-mixer hidden activations
    est += 2 * bt * Sp * Hdp * 4           # channel-mixer hidden (pre/post GELU)
    est += param_bytes                     # single-buffered resident weights
    return est


def _pick_bt(B, Sp, Dp, Hsp, Hdp, param_bytes, budget, x_itemsize, max_rows=512):
    """Largest divisor of B that fits VMEM, keeps bt*Sp near max_rows, and keeps
    the grid >= 2 whenever B >= 2 (so both v7x TensorCores get work)."""
    min_grid = 2 if B >= 2 else 1
    best = 1
    for bt in range(1, B + 1):
        if B % bt != 0:
            continue
        if (B // bt) < min_grid:
            continue
        if bt * Sp > max(Sp, max_rows):
            continue
        if _vmem_estimate(bt, Sp, Dp, Hsp, Hdp, param_bytes, x_itemsize) > budget:
            continue
        best = bt
    return best


def _default_gelu_dtype(mm_dtype):
    """bf16 elementwise GELU only where the VPU has packed bf16 (v6e / v7x)."""
    if jnp.dtype(mm_dtype) != jnp.dtype(jnp.bfloat16):
        return jnp.float32
    try:
        kind = jax.devices()[0].device_kind.lower()
    except Exception:
        kind = ""
    if ("v6" in kind) or ("v7" in kind) or ("7x" in kind):
        return jnp.bfloat16
    return jnp.float32  # v5e and older: no bf16 VALU


def mixer_block(x, params, *, matmul_dtype=jnp.bfloat16, lane=128, sublane=8):
    """x: (B, S, D) float32.  params: dict with nn.Linear weights stored as (in, out)."""
    B, S, D = x.shape
    Hs = params["tok_w1"].shape[1]
    Hd = params["ch_w1"].shape[1]
    Dp = _round_up(D, lane)        # lane-dense embedding dim
    Hdp = _round_up(Hd, lane)      # lane-dense channel hidden dim
    Hsp = _round_up(Hs, lane)      # lane-dense token hidden dim (tw2t last dim)
    Sp = _round_up(S, sublane)     # sublane-aligned sequence length

    f32 = jnp.float32
    mm = jnp.dtype(matmul_dtype)

    def pad2(a, shape):
        return jnp.pad(a, [(0, t - s) for s, t in zip(a.shape, shape)])

    # All params rank-2; matmul weights in matmul dtype, LN params / biases f32.
    # Zero padding keeps every contraction exact (see kernel comments).
    plist = [
        pad2(params["ln1_w"].reshape(1, D), (1, Dp)).astype(f32),
        pad2(params["ln1_b"].reshape(1, D), (1, Dp)).astype(f32),
        pad2(params["tok_w1"].T, (Hsp, Sp)).astype(mm),           # (Hs,S)->(Hsp,Sp)
        pad2(params["tok_b1"].reshape(Hs, 1), (Hsp, 1)).astype(f32),
        pad2(params["tok_w2"].T, (Sp, Hsp)).astype(mm),           # (S,Hs)->(Sp,Hsp)
        pad2(params["tok_b2"].reshape(S, 1), (Sp, 1)).astype(f32),
        pad2(params["ln2_w"].reshape(1, D), (1, Dp)).astype(f32),
        pad2(params["ln2_b"].reshape(1, D), (1, Dp)).astype(f32),
        pad2(params["ch_w1"], (Dp, Hdp)).astype(mm),
        pad2(params["ch_b1"].reshape(1, Hd), (1, Hdp)).astype(f32),
        pad2(params["ch_w2"], (Hdp, Dp)).astype(mm),
        pad2(params["ch_b2"].reshape(1, D), (1, Dp)).astype(f32),
    ]
    param_bytes = int(sum(int(p.size) * p.dtype.itemsize for p in plist))

    budget = _vmem_budget_bytes()
    bt = _pick_bt(B, Sp, Dp, Hsp, Hdp, param_bytes, budget, x.dtype.itemsize)

    xp = x
    if (Sp, Dp) != (S, D):
        xp = jnp.pad(x, ((0, 0), (0, Sp - S), (0, Dp - D)))

    gelu_dtype = _default_gelu_dtype(mm)

    cost = pl.CostEstimate(
        flops=int(4 * B * Sp * Dp * (Hsp + Hdp)),
        transcendentals=int(B * Dp * Hsp + B * Sp * Hdp),
        bytes_accessed=int(2 * B * Sp * Dp * x.dtype.itemsize + param_bytes),
    )

    def run(single_buffer_params, gd):
        kernel = functools.partial(
            mixer_block_kernel, d_true=D, mm_dtype=mm, gelu_dtype=gd)
        # Grid-invariant params: single-buffer them (no 2x VMEM for weights).
        pkw = {"pipeline_mode": pl.Buffered(1)} if single_buffer_params else {}
        param_specs = [pl.BlockSpec(p.shape, lambda g: (0, 0), **pkw) for p in plist]
        out = pl.pallas_call(
            kernel,
            out_shape=jax.ShapeDtypeStruct((B, Sp, Dp), x.dtype),
            grid_spec=pltpu.PrefetchScalarGridSpec(
                num_scalar_prefetch=0,
                grid=(B // bt,),
                in_specs=[pl.BlockSpec((bt, Sp, Dp), lambda g: (g, 0, 0))] + param_specs,
                out_specs=pl.BlockSpec((bt, Sp, Dp), lambda g: (g, 0, 0)),
                scratch_shapes=[pltpu.VMEM((bt, Sp, Dp), jnp.float32)],
            ),
            compiler_params=pltpu.CompilerParams(
                dimension_semantics=("parallel",),
                vmem_limit_bytes=int(budget),
            ),
            cost_estimate=cost,
        )(xp, *plist)
        return jax.block_until_ready(out)

    try:
        # Fast path: single-buffered params + generation-selected GELU dtype.
        out = run(True, gelu_dtype)
    except Exception:
        # Conservative fallback (default double-buffering, f32 GELU).
        out = run(False, jnp.float32)

    if (Sp, Dp) != (S, D):
        out = out[:, :S, :D]
    return out


def init_params(key, seq_len, emb_dim, expansion_factor):
    """Deterministic synthetic init.  Linear weights stored transposed as (in, out)."""
    hs = int(expansion_factor * seq_len)
    hd = int(expansion_factor * emb_dim)
    ks = jax.random.split(key, 8)

    def linear(kw, kb, fan_in, fan_out):
        bound = 1.0 / math.sqrt(fan_in)
        w = jax.random.uniform(kw, (fan_in, fan_out), jnp.float32, -bound, bound)
        b = jax.random.uniform(kb, (fan_out,), jnp.float32, -bound, bound)
        return w, b

    tok_w1, tok_b1 = linear(ks[0], ks[1], seq_len, hs)
    tok_w2, tok_b2 = linear(ks[2], ks[3], hs, seq_len)
    ch_w1, ch_b1 = linear(ks[4], ks[5], emb_dim, hd)
    ch_w2, ch_b2 = linear(ks[6], ks[7], hd, emb_dim)

    return {
        "ln1_w": jnp.ones((emb_dim,), jnp.float32),
        "ln1_b": jnp.zeros((emb_dim,), jnp.float32),
        "tok_w1": tok_w1, "tok_b1": tok_b1,
        "tok_w2": tok_w2, "tok_b2": tok_b2,
        "ln2_w": jnp.ones((emb_dim,), jnp.float32),
        "ln2_b": jnp.zeros((emb_dim,), jnp.float32),
        "ch_w1": ch_w1, "ch_b1": ch_b1,
        "ch_w2": ch_w2, "ch_b2": ch_b2,
    }


def mixer_block_ref(x, p):
    """Pure-JAX reference mirroring the PyTorch forward (f32, highest matmul precision)."""
    hp = lax.Precision.HIGHEST

    def ln(v, w, b):
        mu = jnp.mean(v, -1, keepdims=True)
        var = jnp.mean(jnp.square(v - mu), -1, keepdims=True)
        return (v - mu) / jnp.sqrt(var + LN_EPS) * w + b

    def gelu(v):
        return 0.5 * v * (1.0 + lax.erf(v / math.sqrt(2.0)))

    # token mixer
    t = ln(x, p["ln1_w"], p["ln1_b"])
    t = jnp.swapaxes(t, -2, -1)
    t = jnp.dot(gelu(jnp.dot(t, p["tok_w1"], precision=hp) + p["tok_b1"]),
                p["tok_w2"], precision=hp) + p["tok_b2"]
    t = jnp.swapaxes(t, -2, -1)
    x = x + t
    # channel mixer
    c = ln(x, p["ln2_w"], p["ln2_b"])
    c = jnp.dot(gelu(jnp.dot(c, p["ch_w1"], precision=hp) + p["ch_b1"]),
                p["ch_w2"], precision=hp) + p["ch_b2"]
    return x + c


if __name__ == "__main__":
    B, S, D = 2, 8, 32          # batch, input_sequence_length, embedding_dim
    EXPANSION = 2.0             # config.model.expansion_factor

    key = jax.random.PRNGKey(0)
    kx, kp = jax.random.split(key)
    x = jax.random.normal(kx, (B, S, D), jnp.float32)
    params = init_params(kp, S, D, EXPANSION)

    ref = mixer_block_ref(x, params)

    # 1) f32 MXU path: tight check that the kernel math matches the module.
    out_f32 = jax.block_until_ready(mixer_block(x, params, matmul_dtype=jnp.float32))
    assert out_f32.shape == (B, S, D)
    assert jnp.allclose(out_f32, ref, atol=2e-3, rtol=2e-3), "f32 kernel mismatch vs reference"

    # 2) bf16 MXU inputs / f32 accumulation (fast path): bf16-appropriate tolerance.
    out_bf16 = jax.block_until_ready(mixer_block(x, params, matmul_dtype=jnp.bfloat16))
    assert out_bf16.shape == (B, S, D)
    assert jnp.allclose(out_bf16, ref, atol=1e-1, rtol=5e-2), "bf16 kernel mismatch vs reference"

    print("KERNEL_OK")
</pallas_src>

<mosaic_0001>
module attributes {stable_mosaic.version = 11 : i64} {
  func.func @mixer_block_kernel(%arg0: i32, %arg1: memref<1x8x128xf32, #tpu.memory_space<vmem>>, %arg2: memref<1x128xf32, #tpu.memory_space<vmem>>, %arg3: memref<1x128xf32, #tpu.memory_space<vmem>>, %arg4: memref<128x8xf32, #tpu.memory_space<vmem>>, %arg5: memref<128x1xf32, #tpu.memory_space<vmem>>, %arg6: memref<8x128xf32, #tpu.memory_space<vmem>>, %arg7: memref<8x1xf32, #tpu.memory_space<vmem>>, %arg8: memref<1x128xf32, #tpu.memory_space<vmem>>, %arg9: memref<1x128xf32, #tpu.memory_space<vmem>>, %arg10: memref<128x128xf32, #tpu.memory_space<vmem>>, %arg11: memref<1x128xf32, #tpu.memory_space<vmem>>, %arg12: memref<128x128xf32, #tpu.memory_space<vmem>>, %arg13: memref<1x128xf32, #tpu.memory_space<vmem>>, %arg14: memref<1x8x128xf32, #tpu.memory_space<vmem>>, %arg15: memref<1x8x128xf32, #tpu.memory_space<vmem>>) attributes {dimension_semantics = [#tpu.dimension_semantics<parallel>], iteration_bounds = array<i64: 2>, scalar_prefetch = 0 : i64, scratch_operands = 1 : i64, tpu.core_type = #tpu.core_type<tc>, window_params = [{transform_indices = @transform_0, window_bounds = array<i64: 1, 8, 128>}, {pipeline_mode = #tpu.pipeline_mode<synchronous>, transform_indices = @transform_1, window_bounds = array<i64: 1, 128>}, {pipeline_mode = #tpu.pipeline_mode<synchronous>, transform_indices = @transform_2, window_bounds = array<i64: 1, 128>}, {pipeline_mode = #tpu.pipeline_mode<synchronous>, transform_indices = @transform_3, window_bounds = array<i64: 128, 8>}, {pipeline_mode = #tpu.pipeline_mode<synchronous>, transform_indices = @transform_4, window_bounds = array<i64: 128, 1>}, {pipeline_mode = #tpu.pipeline_mode<synchronous>, transform_indices = @transform_5, window_bounds = array<i64: 8, 128>}, {pipeline_mode = #tpu.pipeline_mode<synchronous>, transform_indices = @transform_6, window_bounds = array<i64: 8, 1>}, {pipeline_mode = #tpu.pipeline_mode<synchronous>, transform_indices = @transform_7, window_bounds = array<i64: 1, 128>}, {pipeline_mode = #tpu.pipeline_mode<synchronous>, transform_indices = @transform_8, window_bounds = array<i64: 1, 128>}, {pipeline_mode = #tpu.pipeline_mode<synchronous>, transform_indices = @transform_9, window_bounds = array<i64: 128, 128>}, {pipeline_mode = #tpu.pipeline_mode<synchronous>, transform_indices = @transform_10, window_bounds = array<i64: 1, 128>}, {pipeline_mode = #tpu.pipeline_mode<synchronous>, transform_indices = @transform_11, window_bounds = array<i64: 128, 128>}, {pipeline_mode = #tpu.pipeline_mode<synchronous>, transform_indices = @transform_12, window_bounds = array<i64: 1, 128>}, {transform_indices = @transform_13, window_bounds = array<i64: 1, 8, 128>}]} {
    %c0 = arith.constant 0 : index
    %c0_0 = arith.constant 0 : index
    %c0_1 = arith.constant 0 : index
    %0 = vector.load %arg1[%c0, %c0_0, %c0_1] : memref<1x8x128xf32, #tpu.memory_space<vmem>>, vector<1x8x128xf32>
    %1 = tpu.iota {dimensions = array<i32: 1>} : vector<1x128xi32>
    %c32_i32 = arith.constant 32 : i32
    %2 = vector.broadcast %c32_i32 : i32 to vector<1x128xi32>
    %3 = arith.cmpi slt, %1, %2 : vector<1x128xi32>
    %c0_2 = arith.constant 0 : index
    %c0_3 = arith.constant 0 : index
    %4 = vector.load %arg2[%c0_2, %c0_3] : memref<1x128xf32, #tpu.memory_space<vmem>>, vector<1x128xf32>
    %c0_4 = arith.constant 0 : index
    %c0_5 = arith.constant 0 : index
    %5 = vector.load %arg3[%c0_4, %c0_5] : memref<1x128xf32, #tpu.memory_space<vmem>>, vector<1x128xf32>
    %cst = arith.constant dense<0.000000e+00> : vector<1x8xf32>
    %6 = vector.multi_reduction <add>, %0, %cst [2] : vector<1x8x128xf32> to vector<1x8xf32>
    %7 = vector.shape_cast %6 : vector<1x8xf32> to vector<1x8x1xf32>
    %cst_6 = arith.constant 3.125000e-02 : f32
    %8 = vector.broadcast %cst_6 : f32 to vector<1x8x1xf32>
    %9 = arith.mulf %7, %8 : vector<1x8x1xf32>
    %10 = vector.broadcast %9 : vector<1x8x1xf32> to vector<1x8x128xf32>
    %11 = arith.subf %0, %10 : vector<1x8x128xf32>
    %cst_7 = arith.constant 0.000000e+00 : f32
    %12 = vector.shape_cast %3 : vector<1x128xi1> to vector<1x1x128xi1>
    %13 = vector.broadcast %12 : vector<1x1x128xi1> to vector<1x8x128xi1>
    %14 = vector.broadcast %cst_7 : f32 to vector<1x8x128xf32>
    %15 = arith.select %13, %11, %14 : vector<1x8x128xi1>, vector<1x8x128xf32>
    %16 = arith.mulf %15, %15 : vector<1x8x128xf32>
    %cst_8 = arith.constant dense<0.000000e+00> : vector<1x8xf32>
    %17 = vector.multi_reduction <add>, %16, %cst_8 [2] : vector<1x8x128xf32> to vector<1x8xf32>
    %18 = vector.shape_cast %17 : vector<1x8xf32> to vector<1x8x1xf32>
    %cst_9 = arith.constant 3.125000e-02 : f32
    %19 = vector.broadcast %cst_9 : f32 to vector<1x8x1xf32>
    %20 = arith.mulf %18, %19 : vector<1x8x1xf32>
    %cst_10 = arith.constant 9.99999974E-6 : f32
    %21 = vector.broadcast %cst_10 : f32 to vector<1x8x1xf32>
    %22 = arith.addf %20, %21 : vector<1x8x1xf32>
    %23 = math.rsqrt %22 : vector<1x8x1xf32>
    %24 = vector.broadcast %23 : vector<1x8x1xf32> to vector<1x8x128xf32>
    %25 = arith.mulf %15, %24 : vector<1x8x128xf32>
    %26 = vector.shape_cast %4 : vector<1x128xf32> to vector<1x1x128xf32>
    %27 = vector.broadcast %26 : vector<1x1x128xf32> to vector<1x8x128xf32>
    %28 = arith.mulf %25, %27 : vector<1x8x128xf32>
    %29 = vector.shape_cast %5 : vector<1x128xf32> to vector<1x1x128xf32>
    %30 = vector.broadcast %29 : vector<1x1x128xf32> to vector<1x8x128xf32>
    %31 = arith.addf %28, %30 : vector<1x8x128xf32>
    %c0_11 = arith.constant 0 : index
    %c0_12 = arith.constant 0 : index
    %32 = vector.load %arg4[%c0_11, %c0_12] : memref<128x8xf32, #tpu.memory_space<vmem>>, vector<128x8xf32>
    %c0_13 = arith.constant 0 : index
    %c0_14 = arith.constant 0 : index
    %33 = vector.load %arg5[%c0_13, %c0_14] : memref<128x1xf32, #tpu.memory_space<vmem>>, vector<128x1xf32>
    %c0_15 = arith.constant 0 : index
    %c0_16 = arith.constant 0 : index
    %34 = vector.load %arg6[%c0_15, %c0_16] : memref<8x128xf32, #tpu.memory_space<vmem>>, vector<8x128xf32>
    %c0_17 = arith.constant 0 : index
    %c0_18 = arith.constant 0 : index
    %35 = vector.load %arg7[%c0_17, %c0_18] : memref<8x1xf32, #tpu.memory_space<vmem>>, vector<8x1xf32>
    %36 = vector.shape_cast %31 : vector<1x8x128xf32> to vector<8x128xf32>
    %cst_19 = arith.constant dense<0.000000e+00> : vector<128x128xf32>
    %37 = tpu.matmul %32, %36, %cst_19 {dimension_numbers = #tpu.dot_dimension_numbers<[1], [0], [0], [1], [0, 0, 1, 1], [], []>} : vector<128x8xf32>, vector<8x128xf32>, vector<128x128xf32> -> vector<128x128xf32>
    %38 = vector.broadcast %33 : vector<128x1xf32> to vector<128x128xf32>
    %39 = arith.addf %37, %38 : vector<128x128xf32>
    %cst_20 = arith.constant 5.000000e-01 : f32
    %40 = vector.broadcast %cst_20 : f32 to vector<128x128xf32>
    %41 = arith.mulf %40, %39 : vector<128x128xf32>
    %cst_21 = arith.constant 0.707106769 : f32
    %42 = vector.broadcast %cst_21 : f32 to vector<128x128xf32>
    %43 = arith.mulf %39, %42 : vector<128x128xf32>
    %44 = math.erf %43 : vector<128x128xf32>
    %cst_22 = arith.constant 1.000000e+00 : f32
    %45 = vector.broadcast %cst_22 : f32 to vector<128x128xf32>
    %46 = arith.addf %45, %44 : vector<128x128xf32>
    %47 = arith.mulf %41, %46 : vector<128x128xf32>
    %cst_23 = arith.constant dense<0.000000e+00> : vector<8x128xf32>
    %48 = tpu.matmul %34, %47, %cst_23 {dimension_numbers = #tpu.dot_dimension_numbers<[1], [0], [0], [1], [0, 0, 1, 1], [], []>} : vector<8x128xf32>, vector<128x128xf32>, vector<8x128xf32> -> vector<8x128xf32>
    %49 = vector.broadcast %35 : vector<8x1xf32> to vector<8x128xf32>
    %50 = arith.addf %48, %49 : vector<8x128xf32>
    %51 = vector.shape_cast %0 : vector<1x8x128xf32> to vector<8x128xf32>
    %52 = arith.addf %51, %50 : vector<8x128xf32>
    %c0_24 = arith.constant 0 : index
    %c0_25 = arith.constant 0 : index
    %c0_26 = arith.constant 0 : index
    %53 = vector.load %arg15[%c0_24, %c0_25, %c0_26] : memref<1x8x128xf32, #tpu.memory_space<vmem>>, vector<1x8x128xf32>
    %54 = vector.shape_cast %53 : vector<1x8x128xf32> to vector<8x128xf32>
    %55 = vector.shape_cast %52 : vector<8x128xf32> to vector<1x8x128xf32>
    tpu.vector_store %arg15[%c0_24, %c0_25, %c0_26], %55 {strides = array<i32>} : memref<1x8x128xf32, #tpu.memory_space<vmem>>, vector<1x8x128xf32>,
    %c0_27 = arith.constant 0 : index
    %c0_28 = arith.constant 0 : index
    %c0_29 = arith.constant 0 : index
    %56 = vector.load %arg15[%c0_27, %c0_28, %c0_29] : memref<1x8x128xf32, #tpu.memory_space<vmem>>, vector<1x8x128xf32>
    %57 = vector.shape_cast %56 : vector<1x8x128xf32> to vector<8x128xf32>
    %c0_30 = arith.constant 0 : index
    %c0_31 = arith.constant 0 : index
    %58 = vector.load %arg8[%c0_30, %c0_31] : memref<1x128xf32, #tpu.memory_space<vmem>>, vector<1x128xf32>
    %c0_32 = arith.constant 0 : index
    %c0_33 = arith.constant 0 : index
    %59 = vector.load %arg9[%c0_32, %c0_33] : memref<1x128xf32, #tpu.memory_space<vmem>>, vector<1x128xf32>
    %cst_34 = arith.constant 0.000000e+00 : f32
    %60 = vector.shape_cast %3 : vector<1x128xi1> to vector<1x128xi1>
    %61 = vector.broadcast %60 : vector<1x128xi1> to vector<8x128xi1>
    %62 = vector.broadcast %cst_34 : f32 to vector<8x128xf32>
    %63 = arith.select %61, %57, %62 : vector<8x128xi1>, vector<8x128xf32>
    %cst_35 = arith.constant dense<0.000000e+00> : vector<8xf32>
    %64 = vector.multi_reduction <add>, %63, %cst_35 [1] : vector<8x128xf32> to vector<8xf32>
    %65 = vector.shape_cast %64 : vector<8xf32> to vector<8x1xf32>
    %cst_36 = arith.constant 3.125000e-02 : f32
    %66 = vector.broadcast %cst_36 : f32 to vector<8x1xf32>
    %67 = arith.mulf %65, %66 : vector<8x1xf32>
    %68 = vector.broadcast %67 : vector<8x1xf32> to vector<8x128xf32>
    %69 = arith.subf %57, %68 : vector<8x128xf32>
    %cst_37 = arith.constant 0.000000e+00 : f32
    %70 = vector.shape_cast %3 : vector<1x128xi1> to vector<1x128xi1>
    %71 = vector.broadcast %70 : vector<1x128xi1> to vector<8x128xi1>
    %72 = vector.broadcast %cst_37 : f32 to vector<8x128xf32>
    %73 = arith.select %71, %69, %72 : vector<8x128xi1>, vector<8x128xf32>
    %74 = arith.mulf %73, %73 : vector<8x128xf32>
    %cst_38 = arith.constant dense<0.000000e+00> : vector<8xf32>
    %75 = vector.multi_reduction <add>, %74, %cst_38 [1] : vector<8x128xf32> to vector<8xf32>
    %76 = vector.shape_cast %75 : vector<8xf32> to vector<8x1xf32>
    %cst_39 = arith.constant 3.125000e-02 : f32
    %77 = vector.broadcast %cst_39 : f32 to vector<8x1xf32>
    %78 = arith.mulf %76, %77 : vector<8x1xf32>
    %cst_40 = arith.constant 9.99999974E-6 : f32
    %79 = vector.broadcast %cst_40 : f32 to vector<8x1xf32>
    %80 = arith.addf %78, %79 : vector<8x1xf32>
    %81 = math.rsqrt %80 : vector<8x1xf32>
    %82 = vector.broadcast %81 : vector<8x1xf32> to vector<8x128xf32>
    %83 = arith.mulf %73, %82 : vector<8x128xf32>
    %84 = vector.broadcast %58 : vector<1x128xf32> to vector<8x128xf32>
    %85 = arith.mulf %83, %84 : vector<8x128xf32>
    %86 = vector.broadcast %59 : vector<1x128xf32> to vector<8x128xf32>
    %87 = arith.addf %85, %86 : vector<8x128xf32>
    %c0_41 = arith.constant 0 : index
    %c0_42 = arith.constant 0 : index
    %88 = vector.load %arg10[%c0_41, %c0_42] : memref<128x128xf32, #tpu.memory_space<vmem>>, vector<128x128xf32>
    %cst_43 = arith.constant dense<0.000000e+00> : vector<8x128xf32>
    %89 = tpu.matmul %87, %88, %cst_43 {dimension_numbers = #tpu.dot_dimension_numbers<[1], [0], [0], [1], [0, 0, 1, 1], [], []>} : vector<8x128xf32>, vector<128x128xf32>, vector<8x128xf32> -> vector<8x128xf32>
    %c0_44 = arith.constant 0 : index
    %c0_45 = arith.constant 0 : index
    %90 = vector.load %arg11[%c0_44, %c0_45] : memref<1x128xf32, #tpu.memory_space<vmem>>, vector<1x128xf32>
    %91 = vector.broadcast %90 : vector<1x128xf32> to vector<8x128xf32>
    %92 = arith.addf %89, %91 : vector<8x128xf32>
    %cst_46 = arith.constant 5.000000e-01 : f32
    %93 = vector.broadcast %cst_46 : f32 to vector<8x128xf32>
    %94 = arith.mulf %93, %92 : vector<8x128xf32>
    %cst_47 = arith.constant 0.707106769 : f32
    %95 = vector.broadcast %cst_47 : f32 to vector<8x128xf32>
    %96 = arith.mulf %92, %95 : vector<8x128xf32>
    %97 = math.erf %96 : vector<8x128xf32>
    %cst_48 = arith.constant 1.000000e+00 : f32
    %98 = vector.broadcast %cst_48 : f32 to vector<8x128xf32>
    %99 = arith.addf %98, %97 : vector<8x128xf32>
    %100 = arith.mulf %94, %99 : vector<8x128xf32>
    %c0_49 = arith.constant 0 : index
    %c0_50 = arith.constant 0 : index
    %101 = vector.load %arg12[%c0_49, %c0_50] : memref<128x128xf32, #tpu.memory_space<vmem>>, vector<128x128xf32>
    %cst_51 = arith.constant dense<0.000000e+00> : vector<8x128xf32>
    %102 = tpu.matmul %100, %101, %cst_51 {dimension_numbers = #tpu.dot_dimension_numbers<[1], [0], [0], [1], [0, 0, 1, 1], [], []>} : vector<8x128xf32>, vector<128x128xf32>, vector<8x128xf32> -> vector<8x128xf32>
    %c0_52 = arith.constant 0 : index
    %c0_53 = arith.constant 0 : index
    %103 = vector.load %arg13[%c0_52, %c0_53] : memref<1x128xf32, #tpu.memory_space<vmem>>, vector<1x128xf32>
    %104 = vector.broadcast %103 : vector<1x128xf32> to vector<8x128xf32>
    %105 = arith.addf %102, %104 : vector<8x128xf32>
    %106 = arith.addf %57, %105 : vector<8x128xf32>
    %107 = vector.shape_cast %106 : vector<8x128xf32> to vector<1x8x128xf32>
    %c0_54 = arith.constant 0 : index
    %c0_55 = arith.constant 0 : index
    %c0_56 = arith.constant 0 : index
    %108 = vector.load %arg14[%c0_54, %c0_55, %c0_56] : memref<1x8x128xf32, #tpu.memory_space<vmem>>, vector<1x8x128xf32>
    tpu.vector_store %arg14[%c0_54, %c0_55, %c0_56], %107 {strides = array<i32>} : memref<1x8x128xf32, #tpu.memory_space<vmem>>, vector<1x8x128xf32>,
    return
  }
  func.func @transform_0(%arg0: i32) -> (i32, i32, i32) {
    %c0_i32 = arith.constant 0 : i32
    %c0_i32_0 = arith.constant 0 : i32
    %c0_i32_1 = arith.constant 0 : i32
    return %arg0, %c0_i32, %c0_i32_0 : i32, i32, i32
  }
  func.func @transform_1(%arg0: i32) -> (i32, i32) {
    %c0_i32 = arith.constant 0 : i32
    %c0_i32_0 = arith.constant 0 : i32
    %c0_i32_1 = arith.constant 0 : i32
    return %c0_i32, %c0_i32_0 : i32, i32
  }
  func.func @transform_2(%arg0: i32) -> (i32, i32) {
    %c0_i32 = arith.constant 0 : i32
    %c0_i32_0 = arith.constant 0 : i32
    %c0_i32_1 = arith.constant 0 : i32
    return %c0_i32, %c0_i32_0 : i32, i32
  }
  func.func @transform_3(%arg0: i32) -> (i32, i32) {
    %c0_i32 = arith.constant 0 : i32
    %c0_i32_0 = arith.constant 0 : i32
    %c0_i32_1 = arith.constant 0 : i32
    return %c0_i32, %c0_i32_0 : i32, i32
  }
  func.func @transform_4(%arg0: i32) -> (i32, i32) {
    %c0_i32 = arith.constant 0 : i32
    %c0_i32_0 = arith.constant 0 : i32
    %c0_i32_1 = arith.constant 0 : i32
    return %c0_i32, %c0_i32_0 : i32, i32
  }
  func.func @transform_5(%arg0: i32) -> (i32, i32) {
    %c0_i32 = arith.constant 0 : i32
    %c0_i32_0 = arith.constant 0 : i32
    %c0_i32_1 = arith.constant 0 : i32
    return %c0_i32, %c0_i32_0 : i32, i32
  }
  func.func @transform_6(%arg0: i32) -> (i32, i32) {
    %c0_i32 = arith.constant 0 : i32
    %c0_i32_0 = arith.constant 0 : i32
    %c0_i32_1 = arith.constant 0 : i32
    return %c0_i32, %c0_i32_0 : i32, i32
  }
  func.func @transform_7(%arg0: i32) -> (i32, i32) {
    %c0_i32 = arith.constant 0 : i32
    %c0_i32_0 = arith.constant 0 : i32
    %c0_i32_1 = arith.constant 0 : i32
    return %c0_i32, %c0_i32_0 : i32, i32
  }
  func.func @transform_8(%arg0: i32) -> (i32, i32) {
    %c0_i32 = arith.constant 0 : i32
    %c0_i32_0 = arith.constant 0 : i32
    %c0_i32_1 = arith.constant 0 : i32
    return %c0_i32, %c0_i32_0 : i32, i32
  }
  func.func @transform_9(%arg0: i32) -> (i32, i32) {
    %c0_i32 = arith.constant 0 : i32
    %c0_i32_0 = arith.constant 0 : i32
    %c0_i32_1 = arith.constant 0 : i32
    return %c0_i32, %c0_i32_0 : i32, i32
  }
  func.func @transform_10(%arg0: i32) -> (i32, i32) {
    %c0_i32 = arith.constant 0 : i32
    %c0_i32_0 = arith.constant 0 : i32
    %c0_i32_1 = arith.constant 0 : i32
    return %c0_i32, %c0_i32_0 : i32, i32
  }
  func.func @transform_11(%arg0: i32) -> (i32, i32) {
    %c0_i32 = arith.constant 0 : i32
    %c0_i32_0 = arith.constant 0 : i32
    %c0_i32_1 = arith.constant 0 : i32
    return %c0_i32, %c0_i32_0 : i32, i32
  }
  func.func @transform_12(%arg0: i32) -> (i32, i32) {
    %c0_i32 = arith.constant 0 : i32
    %c0_i32_0 = arith.constant 0 : i32
    %c0_i32_1 = arith.constant 0 : i32
    return %c0_i32, %c0_i32_0 : i32, i32
  }
  func.func @transform_13(%arg0: i32) -> (i32, i32, i32) {
    %c0_i32 = arith.constant 0 : i32
    %c0_i32_0 = arith.constant 0 : i32
    %c0_i32_1 = arith.constant 0 : i32
    return %arg0, %c0_i32, %c0_i32_0 : i32, i32, i32
  }
}

module attributes {stable_mosaic.version = 11 : i64} {
  func.func @mixer_block_kernel(%arg0: i32, %arg1: memref<1x8x128xf32, #tpu.memory_space<vmem>>, %arg2: memref<1x128xf32, #tpu.memory_space<vmem>>, %arg3: memref<1x128xf32, #tpu.memory_space<vmem>>, %arg4: memref<128x8xf32, #tpu.memory_space<vmem>>, %arg5: memref<128x1xf32, #tpu.memory_space<vmem>>, %arg6: memref<8x128xf32, #tpu.memory_space<vmem>>, %arg7: memref<8x1xf32, #tpu.memory_space<vmem>>, %arg8: memref<1x128xf32, #tpu.memory_space<vmem>>, %arg9: memref<1x128xf32, #tpu.memory_space<vmem>>, %arg10: memref<128x128xf32, #tpu.memory_space<vmem>>, %arg11: memref<1x128xf32, #tpu.memory_space<vmem>>, %arg12: memref<128x128xf32, #tpu.memory_space<vmem>>, %arg13: memref<1x128xf32, #tpu.memory_space<vmem>>, %arg14: memref<1x8x128xf32, #tpu.memory_space<vmem>>, %arg15: memref<1x8x128xf32, #tpu.memory_space<vmem>>) attributes {dimension_semantics = [#tpu.dimension_semantics<parallel>], iteration_bounds = array<i64: 2>, scalar_prefetch = 0 : i64, scratch_operands = 1 : i64, tpu.core_type = #tpu.core_type<tc>, window_params = [{transform_indices = @transform_0, window_bounds = array<i64: 1, 8, 128>}, {pipeline_mode = #tpu.pipeline_mode<synchronous>, transform_indices = @transform_1, window_bounds = array<i64: 1, 128>}, {pipeline_mode = #tpu.pipeline_mode<synchronous>, transform_indices = @transform_2, window_bounds = array<i64: 1, 128>}, {pipeline_mode = #tpu.pipeline_mode<synchronous>, transform_indices = @transform_3, window_bounds = array<i64: 128, 8>}, {pipeline_mode = #tpu.pipeline_mode<synchronous>, transform_indices = @transform_4, window_bounds = array<i64: 128, 1>}, {pipeline_mode = #tpu.pipeline_mode<synchronous>, transform_indices = @transform_5, window_bounds = array<i64: 8, 128>}, {pipeline_mode = #tpu.pipeline_mode<synchronous>, transform_indices = @transform_6, window_bounds = array<i64: 8, 1>}, {pipeline_mode = #tpu.pipeline_mode<synchronous>, transform_indices = @transform_7, window_bounds = array<i64: 1, 128>}, {pipeline_mode = #tpu.pipeline_mode<synchronous>, transform_indices = @transform_8, window_bounds = array<i64: 1, 128>}, {pipeline_mode = #tpu.pipeline_mode<synchronous>, transform_indices = @transform_9, window_bounds = array<i64: 128, 128>}, {pipeline_mode = #tpu.pipeline_mode<synchronous>, transform_indices = @transform_10, window_bounds = array<i64: 1, 128>}, {pipeline_mode = #tpu.pipeline_mode<synchronous>, transform_indices = @transform_11, window_bounds = array<i64: 128, 128>}, {pipeline_mode = #tpu.pipeline_mode<synchronous>, transform_indices = @transform_12, window_bounds = array<i64: 1, 128>}, {transform_indices = @transform_13, window_bounds = array<i64: 1, 8, 128>}]} {
    %c0 = arith.constant 0 : index
    %c0_0 = arith.constant 0 : index
    %c0_1 = arith.constant 0 : index
    %0 = vector.load %arg1[%c0, %c0_0, %c0_1] : memref<1x8x128xf32, #tpu.memory_space<vmem>>, vector<1x8x128xf32>
    %1 = tpu.iota {dimensions = array<i32: 1>} : vector<1x128xi32>
    %c32_i32 = arith.constant 32 : i32
    %2 = vector.broadcast %c32_i32 : i32 to vector<1x128xi32>
    %3 = arith.cmpi slt, %1, %2 : vector<1x128xi32>
    %c0_2 = arith.constant 0 : index
    %c0_3 = arith.constant 0 : index
    %4 = vector.load %arg2[%c0_2, %c0_3] : memref<1x128xf32, #tpu.memory_space<vmem>>, vector<1x128xf32>
    %c0_4 = arith.constant 0 : index
    %c0_5 = arith.constant 0 : index
    %5 = vector.load %arg3[%c0_4, %c0_5] : memref<1x128xf32, #tpu.memory_space<vmem>>, vector<1x128xf32>
    %cst = arith.constant dense<0.000000e+00> : vector<1x8xf32>
    %6 = vector.multi_reduction <add>, %0, %cst [2] : vector<1x8x128xf32> to vector<1x8xf32>
    %7 = vector.shape_cast %6 : vector<1x8xf32> to vector<1x8x1xf32>
    %cst_6 = arith.constant 3.125000e-02 : f32
    %8 = vector.broadcast %cst_6 : f32 to vector<1x8x1xf32>
    %9 = arith.mulf %7, %8 : vector<1x8x1xf32>
    %10 = vector.broadcast %9 : vector<1x8x1xf32> to vector<1x8x128xf32>
    %11 = arith.subf %0, %10 : vector<1x8x128xf32>
    %cst_7 = arith.constant 0.000000e+00 : f32
    %12 = vector.shape_cast %3 : vector<1x128xi1> to vector<1x1x128xi1>
    %13 = vector.broadcast %12 : vector<1x1x128xi1> to vector<1x8x128xi1>
    %14 = vector.broadcast %cst_7 : f32 to vector<1x8x128xf32>
    %15 = arith.select %13, %11, %14 : vector<1x8x128xi1>, vector<1x8x128xf32>
    %16 = arith.mulf %15, %15 : vector<1x8x128xf32>
    %cst_8 = arith.constant dense<0.000000e+00> : vector<1x8xf32>
    %17 = vector.multi_reduction <add>, %16, %cst_8 [2] : vector<1x8x128xf32> to vector<1x8xf32>
    %18 = vector.shape_cast %17 : vector<1x8xf32> to vector<1x8x1xf32>
    %cst_9 = arith.constant 3.125000e-02 : f32
    %19 = vector.broadcast %cst_9 : f32 to vector<1x8x1xf32>
    %20 = arith.mulf %18, %19 : vector<1x8x1xf32>
    %cst_10 = arith.constant 9.99999974E-6 : f32
    %21 = vector.broadcast %cst_10 : f32 to vector<1x8x1xf32>
    %22 = arith.addf %20, %21 : vector<1x8x1xf32>
    %23 = math.rsqrt %22 : vector<1x8x1xf32>
    %24 = vector.broadcast %23 : vector<1x8x1xf32> to vector<1x8x128xf32>
    %25 = arith.mulf %15, %24 : vector<1x8x128xf32>
    %26 = vector.shape_cast %4 : vector<1x128xf32> to vector<1x1x128xf32>
    %27 = vector.broadcast %26 : vector<1x1x128xf32> to vector<1x8x128xf32>
    %28 = arith.mulf %25, %27 : vector<1x8x128xf32>
    %29 = vector.shape_cast %5 : vector<1x128xf32> to vector<1x1x128xf32>
    %30 = vector.broadcast %29 : vector<1x1x128xf32> to vector<1x8x128xf32>
    %31 = arith.addf %28, %30 : vector<1x8x128xf32>
    %c0_11 = arith.constant 0 : index
    %c0_12 = arith.constant 0 : index
    %32 = vector.load %arg4[%c0_11, %c0_12] : memref<128x8xf32, #tpu.memory_space<vmem>>, vector<128x8xf32>
    %c0_13 = arith.constant 0 : index
    %c0_14 = arith.constant 0 : index
    %33 = vector.load %arg5[%c0_13, %c0_14] : memref<128x1xf32, #tpu.memory_space<vmem>>, vector<128x1xf32>
    %c0_15 = arith.constant 0 : index
    %c0_16 = arith.constant 0 : index
    %34 = vector.load %arg6[%c0_15, %c0_16] : memref<8x128xf32, #tpu.memory_space<vmem>>, vector<8x128xf32>
    %c0_17 = arith.constant 0 : index
    %c0_18 = arith.constant 0 : index
    %35 = vector.load %arg7[%c0_17, %c0_18] : memref<8x1xf32, #tpu.memory_space<vmem>>, vector<8x1xf32>
    %36 = vector.shape_cast %31 : vector<1x8x128xf32> to vector<8x128xf32>
    %cst_19 = arith.constant dense<0.000000e+00> : vector<128x128xf32>
    %37 = tpu.matmul %32, %36, %cst_19 {dimension_numbers = #tpu.dot_dimension_numbers<[1], [0], [0], [1], [0, 0, 1, 1], [], []>} : vector<128x8xf32>, vector<8x128xf32>, vector<128x128xf32> -> vector<128x128xf32>
    %38 = vector.broadcast %33 : vector<128x1xf32> to vector<128x128xf32>
    %39 = arith.addf %37, %38 : vector<128x128xf32>
    %cst_20 = arith.constant 5.000000e-01 : f32
    %40 = vector.broadcast %cst_20 : f32 to vector<128x128xf32>
    %41 = arith.mulf %40, %39 : vector<128x128xf32>
    %cst_21 = arith.constant 0.707106769 : f32
    %42 = vector.broadcast %cst_21 : f32 to vector<128x128xf32>
    %43 = arith.mulf %39, %42 : vector<128x128xf32>
    %44 = math.erf %43 : vector<128x128xf32>
    %cst_22 = arith.constant 1.000000e+00 : f32
    %45 = vector.broadcast %cst_22 : f32 to vector<128x128xf32>
    %46 = arith.addf %45, %44 : vector<128x128xf32>
    %47 = arith.mulf %41, %46 : vector<128x128xf32>
    %cst_23 = arith.constant dense<0.000000e+00> : vector<8x128xf32>
    %48 = tpu.matmul %34, %47, %cst_23 {dimension_numbers = #tpu.dot_dimension_numbers<[1], [0], [0], [1], [0, 0, 1, 1], [], []>} : vector<8x128xf32>, vector<128x128xf32>, vector<8x128xf32> -> vector<8x128xf32>
    %49 = vector.broadcast %35 : vector<8x1xf32> to vector<8x128xf32>
    %50 = arith.addf %48, %49 : vector<8x128xf32>
    %51 = vector.shape_cast %0 : vector<1x8x128xf32> to vector<8x128xf32>
    %52 = arith.addf %51, %50 : vector<8x128xf32>
    %c0_24 = arith.constant 0 : index
    %c0_25 = arith.constant 0 : index
    %c0_26 = arith.constant 0 : index
    %53 = vector.load %arg15[%c0_24, %c0_25, %c0_26] : memref<1x8x128xf32, #tpu.memory_space<vmem>>, vector<1x8x128xf32>
    %54 = vector.shape_cast %53 : vector<1x8x128xf32> to vector<8x128xf32>
    %55 = vector.shape_cast %52 : vector<8x128xf32> to vector<1x8x128xf32>
    tpu.vector_store %arg15[%c0_24, %c0_25, %c0_26], %55 {strides = array<i32>} : memref<1x8x128xf32, #tpu.memory_space<vmem>>, vector<1x8x128xf32>,
    %c0_27 = arith.constant 0 : index
    %c0_28 = arith.constant 0 : index
    %c0_29 = arith.constant 0 : index
    %56 = vector.load %arg15[%c0_27, %c0_28, %c0_29] : memref<1x8x128xf32, #tpu.memory_space<vmem>>, vector<1x8x128xf32>
    %57 = vector.shape_cast %56 : vector<1x8x128xf32> to vector<8x128xf32>
    %c0_30 = arith.constant 0 : index
    %c0_31 = arith.constant 0 : index
    %58 = vector.load %arg8[%c0_30, %c0_31] : memref<1x128xf32, #tpu.memory_space<vmem>>, vector<1x128xf32>
    %c0_32 = arith.constant 0 : index
    %c0_33 = arith.constant 0 : index
    %59 = vector.load %arg9[%c0_32, %c0_33] : memref<1x128xf32, #tpu.memory_space<vmem>>, vector<1x128xf32>
    %cst_34 = arith.constant 0.000000e+00 : f32
    %60 = vector.shape_cast %3 : vector<1x128xi1> to vector<1x128xi1>
    %61 = vector.broadcast %60 : vector<1x128xi1> to vector<8x128xi1>
    %62 = vector.broadcast %cst_34 : f32 to vector<8x128xf32>
    %63 = arith.select %61, %57, %62 : vector<8x128xi1>, vector<8x128xf32>
    %cst_35 = arith.constant dense<0.000000e+00> : vector<8xf32>
    %64 = vector.multi_reduction <add>, %63, %cst_35 [1] : vector<8x128xf32> to vector<8xf32>
    %65 = vector.shape_cast %64 : vector<8xf32> to vector<8x1xf32>
    %cst_36 = arith.constant 3.125000e-02 : f32
    %66 = vector.broadcast %cst_36 : f32 to vector<8x1xf32>
    %67 = arith.mulf %65, %66 : vector<8x1xf32>
    %68 = vector.broadcast %67 : vector<8x1xf32> to vector<8x128xf32>
    %69 = arith.subf %57, %68 : vector<8x128xf32>
    %cst_37 = arith.constant 0.000000e+00 : f32
    %70 = vector.shape_cast %3 : vector<1x128xi1> to vector<1x128xi1>
    %71 = vector.broadcast %70 : vector<1x128xi1> to vector<8x128xi1>
    %72 = vector.broadcast %cst_37 : f32 to vector<8x128xf32>
    %73 = arith.select %71, %69, %72 : vector<8x128xi1>, vector<8x128xf32>
    %74 = arith.mulf %73, %73 : vector<8x128xf32>
    %cst_38 = arith.constant dense<0.000000e+00> : vector<8xf32>
    %75 = vector.multi_reduction <add>, %74, %cst_38 [1] : vector<8x128xf32> to vector<8xf32>
    %76 = vector.shape_cast %75 : vector<8xf32> to vector<8x1xf32>
    %cst_39 = arith.constant 3.125000e-02 : f32
    %77 = vector.broadcast %cst_39 : f32 to vector<8x1xf32>
    %78 = arith.mulf %76, %77 : vector<8x1xf32>
    %cst_40 = arith.constant 9.99999974E-6 : f32
    %79 = vector.broadcast %cst_40 : f32 to vector<8x1xf32>
    %80 = arith.addf %78, %79 : vector<8x1xf32>
    %81 = math.rsqrt %80 : vector<8x1xf32>
    %82 = vector.broadcast %81 : vector<8x1xf32> to vector<8x128xf32>
    %83 = arith.mulf %73, %82 : vector<8x128xf32>
    %84 = vector.broadcast %58 : vector<1x128xf32> to vector<8x128xf32>
    %85 = arith.mulf %83, %84 : vector<8x128xf32>
    %86 = vector.broadcast %59 : vector<1x128xf32> to vector<8x128xf32>
    %87 = arith.addf %85, %86 : vector<8x128xf32>
    %c0_41 = arith.constant 0 : index
    %c0_42 = arith.constant 0 : index
    %88 = vector.load %arg10[%c0_41, %c0_42] : memref<128x128xf32, #tpu.memory_space<vmem>>, vector<128x128xf32>
    %cst_43 = arith.constant dense<0.000000e+00> : vector<8x128xf32>
    %89 = tpu.matmul %87, %88, %cst_43 {dimension_numbers = #tpu.dot_dimension_numbers<[1], [0], [0], [1], [0, 0, 1, 1], [], []>} : vector<8x128xf32>, vector<128x128xf32>, vector<8x128xf32> -> vector<8x128xf32>
    %c0_44 = arith.constant 0 : index
    %c0_45 = arith.constant 0 : index
    %90 = vector.load %arg11[%c0_44, %c0_45] : memref<1x128xf32, #tpu.memory_space<vmem>>, vector<1x128xf32>
    %91 = vector.broadcast %90 : vector<1x128xf32> to vector<8x128xf32>
    %92 = arith.addf %89, %91 : vector<8x128xf32>
    %cst_46 = arith.constant 5.000000e-01 : f32
    %93 = vector.broadcast %cst_46 : f32 to vector<8x128xf32>
    %94 = arith.mulf %93, %92 : vector<8x128xf32>
    %cst_47 = arith.constant 0.707106769 : f32
    %95 = vector.broadcast %cst_47 : f32 to vector<8x128xf32>
    %96 = arith.mulf %92, %95 : vector<8x128xf32>
    %97 = math.erf %96 : vector<8x128xf32>
    %cst_48 = arith.constant 1.000000e+00 : f32
    %98 = vector.broadcast %cst_48 : f32 to vector<8x128xf32>
    %99 = arith.addf %98, %97 : vector<8x128xf32>
    %100 = arith.mulf %94, %99 : vector<8x128xf32>
    %c0_49 = arith.constant 0 : index
    %c0_50 = arith.constant 0 : index
    %101 = vector.load %arg12[%c0_49, %c0_50] : memref<128x128xf32, #tpu.memory_space<vmem>>, vector<128x128xf32>
    %cst_51 = arith.constant dense<0.000000e+00> : vector<8x128xf32>
    %102 = tpu.matmul %100, %101, %cst_51 {dimension_numbers = #tpu.dot_dimension_numbers<[1], [0], [0], [1], [0, 0, 1, 1], [], []>} : vector<8x128xf32>, vector<128x128xf32>, vector<8x128xf32> -> vector<8x128xf32>
    %c0_52 = arith.constant 0 : index
    %c0_53 = arith.constant 0 : index
    %103 = vector.load %arg13[%c0_52, %c0_53] : memref<1x128xf32, #tpu.memory_space<vmem>>, vector<1x128xf32>
    %104 = vector.broadcast %103 : vector<1x128xf32> to vector<8x128xf32>
    %105 = arith.addf %102, %104 : vector<8x128xf32>
    %106 = arith.addf %57, %105 : vector<8x128xf32>
    %107 = vector.shape_cast %106 : vector<8x128xf32> to vector<1x8x128xf32>
    %c0_54 = arith.constant 0 : index
    %c0_55 = arith.constant 0 : index
    %c0_56 = arith.constant 0 : index
    %108 = vector.load %arg14[%c0_54, %c0_55, %c0_56] : memref<1x8x128xf32, #tpu.memory_space<vmem>>, vector<1x8x128xf32>
    tpu.vector_store %arg14[%c0_54, %c0_55, %c0_56], %107 {strides = array<i32>} : memref<1x8x128xf32, #tpu.memory_space<vmem>>, vector<1x8x128xf32>,
    return
  }
  func.func @transform_0(%arg0: i32) -> (i32, i32, i32) {
    %c0_i32 = arith.constant 0 : i32
    %c0_i32_0 = arith.constant 0 : i32
    %c0_i32_1 = arith.constant 0 : i32
    return %arg0, %c0_i32, %c0_i32_0 : i32, i32, i32
  }
  func.func @transform_1(%arg0: i32) -> (i32, i32) {
    %c0_i32 = arith.constant 0 : i32
    %c0_i32_0 = arith.constant 0 : i32
    %c0_i32_1 = arith.constant 0 : i32
    return %c0_i32, %c0_i32_0 : i32, i32
  }
  func.func @transform_2(%arg0: i32) -> (i32, i32) {
    %c0_i32 = arith.constant 0 : i32
    %c0_i32_0 = arith.constant 0 : i32
    %c0_i32_1 = arith.constant 0 : i32
    return %c0_i32, %c0_i32_0 : i32, i32
  }
  func.func @transform_3(%arg0: i32) -> (i32, i32) {
    %c0_i32 = arith.constant 0 : i32
    %c0_i32_0 = arith.constant 0 : i32
    %c0_i32_1 = arith.constant 0 : i32
    return %c0_i32, %c0_i32_0 : i32, i32
  }
  func.func @transform_4(%arg0: i32) -> (i32, i32) {
    %c0_i32 = arith.constant 0 : i32
    %c0_i32_0 = arith.constant 0 : i32
    %c0_i32_1 = arith.constant 0 : i32
    return %c0_i32, %c0_i32_0 : i32, i32
  }
  func.func @transform_5(%arg0: i32) -> (i32, i32) {
    %c0_i32 = arith.constant 0 : i32
    %c0_i32_0 = arith.constant 0 : i32
    %c0_i32_1 = arith.constant 0 : i32
    return %c0_i32, %c0_i32_0 : i32, i32
  }
  func.func @transform_6(%arg0: i32) -> (i32, i32) {
    %c0_i32 = arith.constant 0 : i32
    %c0_i32_0 = arith.constant 0 : i32
    %c0_i32_1 = arith.constant 0 : i32
    return %c0_i32, %c0_i32_0 : i32, i32
  }
  func.func @transform_7(%arg0: i32) -> (i32, i32) {
    %c0_i32 = arith.constant 0 : i32
    %c0_i32_0 = arith.constant 0 : i32
    %c0_i32_1 = arith.constant 0 : i32
    return %c0_i32, %c0_i32_0 : i32, i32
  }
  func.func @transform_8(%arg0: i32) -> (i32, i32) {
    %c0_i32 = arith.constant 0 : i32
    %c0_i32_0 = arith.constant 0 : i32
    %c0_i32_1 = arith.constant 0 : i32
    return %c0_i32, %c0_i32_0 : i32, i32
  }
  func.func @transform_9(%arg0: i32) -> (i32, i32) {
    %c0_i32 = arith.constant 0 : i32
    %c0_i32_0 = arith.constant 0 : i32
    %c0_i32_1 = arith.constant 0 : i32
    return %c0_i32, %c0_i32_0 : i32, i32
  }
  func.func @transform_10(%arg0: i32) -> (i32, i32) {
    %c0_i32 = arith.constant 0 : i32
    %c0_i32_0 = arith.constant 0 : i32
    %c0_i32_1 = arith.constant 0 : i32
    return %c0_i32, %c0_i32_0 : i32, i32
  }
  func.func @transform_11(%arg0: i32) -> (i32, i32) {
    %c0_i32 = arith.constant 0 : i32
    %c0_i32_0 = arith.constant 0 : i32
    %c0_i32_1 = arith.constant 0 : i32
    return %c0_i32, %c0_i32_0 : i32, i32
  }
  func.func @transform_12(%arg0: i32) -> (i32, i32) {
    %c0_i32 = arith.constant 0 : i32
    %c0_i32_0 = arith.constant 0 : i32
    %c0_i32_1 = arith.constant 0 : i32
    return %c0_i32, %c0_i32_0 : i32, i32
  }
  func.func @transform_13(%arg0: i32) -> (i32, i32, i32) {
    %c0_i32 = arith.constant 0 : i32
    %c0_i32_0 = arith.constant 0 : i32
    %c0_i32_1 = arith.constant 0 : i32
    return %arg0, %c0_i32, %c0_i32_0 : i32, i32, i32
  }
}

</mosaic_0001>

<llo_original>
// kernel: tpu_custom_call.1
$region0: #{tpu_custom_call.1}
  #allocation0 [shape = 'u32[]', space=smem, size = 0x4, offset = 0x4, fixed_abs, tag = 'smem constant byte address 0x4 - core index']
  #allocation1 [shape = 'u32[144,128]{1,0:T(1,128)}', space=vmem, size = 0x12000, scoped, tag = 'internal scratch']
  #allocation2 [shape = 'f32[1,8,128]{2,1,0:T(8,128)}', space=vmem, size = 0x1000, scoped, tag = 'scratch operand']
  %s0 = inlined_call_operand.vmem [shape: f32[2,8,128], index: 0, kind: input, shape index: {}]
  %s1 = inlined_call_operand.vmem [shape: f32[1,128], index: 1, kind: input, shape index: {}]
  %s2 = inlined_call_operand.hbm [shape: f32[1,128], index: 2, kind: input, shape index: {}]
  %s3 = inlined_call_operand.vmem [shape: f32[128,8], index: 3, kind: input, shape index: {}]
  %s4 = inlined_call_operand.vmem [shape: f32[128,1], index: 4, kind: input, shape index: {}]
  %s5 = inlined_call_operand.vmem [shape: f32[8,128], index: 5, kind: input, shape index: {}]
  %s6 = inlined_call_operand.vmem [shape: f32[8,1], index: 6, kind: input, shape index: {}]
  %s7 = inlined_call_operand.vmem [shape: f32[1,128], index: 7, kind: input, shape index: {}]
  %s8 = inlined_call_operand.vmem [shape: f32[1,128], index: 8, kind: input, shape index: {}]
  %s9 = inlined_call_operand.vmem [shape: f32[128,128], index: 9, kind: input, shape index: {}]
  %s10 = inlined_call_operand.vmem [shape: f32[1,128], index: 10, kind: input, shape index: {}]
  %s11 = inlined_call_operand.vmem [shape: f32[128,128], index: 11, kind: input, shape index: {}]
  %s12 = inlined_call_operand.vmem [shape: f32[1,128], index: 12, kind: input, shape index: {}]
  %s13 = inlined_call_operand.hbm [shape: f32[2,8,128], index: 13, kind: output, shape index: {}]
  %s14 = sld [smem:[#allocation0]]
  $region89: #{tpu_custom_call.1} parent=0
    _
  %s16 = ssub.s32 1, %s14
  %s17 = scalar_select 0, %s16, %s14
  $region1: #{tpu_custom_call.1} parent=0
    #allocation3 [shape = 'u8[512]{0}', space=vmem, size = 0x400, scoped, tag = 'input window, operand 2, single buffered']
    #allocation4 [shape = 's32[2]{0}', space=sflag, size = 0x8, scoped, tag = 'scoped memory for tpu_custom_call.1']
    #allocation5 [shape = 's32[2]{0}', space=sflag, size = 0x8, scoped, tag = 'scoped memory for tpu_custom_call.1']
    #allocation6 [shape = 'u8[8192]{0}', space=vmem, size = 0x2000, scoped, tag = 'output window, operand 0']
    %18 = vsyncpa [#allocation4], 0
    %19 = vsyncpa [#allocation5], 0
    %s20 = scalar_lea.sflag [#allocation5], 1
    %21 = vsyncpa %s20, 0
    loop: start=0, step=1, limit=4
    $region2: #{tpu_custom_call.1} parent=1 // loop_pre_header
      _
    $region3: #{tpu_custom_call.1} parent=1 // loop_header
      %s23 = sphi 0, %s27
      %p24 = scmp.ge.s32.totalorder %s23, 4
      %s33 = sphi 0, %s35
      %s36 = sphi 0, %s33
      %s37 = sphi 0, %s36
      %s53 = sphi 0, %s37
      %s57 = sphi 0, %s57
      %s59 = sphi 0, %s57
      %s60 = sphi 0, %s59
      %s74 = sphi 0, %s60
      %s78 = sphi 0, %s78
      %s80 = sphi 0, %s78
      %s81 = sphi 0, %s80
      %s95 = sphi 0, %s81
      %s99 = sphi 0, %s99
      %s101 = sphi 0, %s99
      %s102 = sphi 0, %s101
      %s116 = sphi 0, %s102
      %s120 = sphi 0, %s120
      %s122 = sphi 0, %s120
      %s123 = sphi 0, %s122
      %s137 = sphi 0, %s123
      %s141 = sphi 0, %s141
      %s143 = sphi 0, %s141
      %s144 = sphi 0, %s143
      %s158 = sphi 0, %s144
      %s162 = sphi 0, %s162
      %s164 = sphi 0, %s162
      %s165 = sphi 0, %s164
      %s179 = sphi 0, %s165
      %s183 = sphi 0, %s183
      %s185 = sphi 0, %s183
      %s186 = sphi 0, %s185
      %s200 = sphi 0, %s186
      %s204 = sphi 0, %s204
      %s206 = sphi 0, %s204
      %s207 = sphi 0, %s206
      %s221 = sphi 0, %s207
      %s225 = sphi 0, %s225
      %s227 = sphi 0, %s225
      %s228 = sphi 0, %s227
      %s242 = sphi 0, %s228
      %s246 = sphi 0, %s246
      %s248 = sphi 0, %s246
      %s249 = sphi 0, %s248
      %s263 = sphi 0, %s249
      %s267 = sphi 0, %s267
      %s269 = sphi 0, %s267
      %s270 = sphi 0, %s269
      %s284 = sphi 0, %s270
      %s288 = sphi 0, %s288
      %s290 = sphi 0, %s288
      %s291 = sphi 0, %s290
      %s305 = sphi 0, %s291
      %s311 = sphi 0, %s313
      %s314 = sphi 0, %s311
      %s315 = sphi 0, %s314
      %s331 = sphi 0, %s315
    $region4: #{tpu_custom_call.1} parent=1 // loop_header_branch
      %26 = sbr.rel (%p24) target = $region8
    $region5: #{tpu_custom_call.1} parent=1 // loop_body
      %s28 = ssub.s32 %s23, 1
      %s29 = ssub.s32 %s23, 2
      %s30 = sadd.s32 %s23, 1
      %s31 = ssub.s32 %s23, %s30
      %p32 = scmp.eq.s32.totalorder %s31, 0
      %s34 = sadd.s32 %s33, 1
      %s35 = scalar_select %p32, %s33, %s34
      %p38 = pneg %p32
      %p39 = scmp.eq.s32.totalorder %s23, 1
      %p40 = por %p38, %p39
      %p41 = scmp.ne.s32.totalorder %s33, %s36
      %p42 = scmp.eq.s32.totalorder %s23, 0
      %p43 = por %p41, %p42
      %p44 = scmp.ne.s32.totalorder %s33, %s36
      %p45 = scmp.eq.s32.totalorder %s28, 1
      %p46 = por %p44, %p45
      %p47 = scmp.ne.s32.totalorder %s36, %s37
      %p48 = scmp.eq.s32.totalorder %s28, 0
      %p49 = por %p47, %p48
      %p50 = scmp.ne.s32.totalorder %s36, %s37
      %p51 = scmp.eq.s32.totalorder %s29, 1
      %p52 = por %p50, %p51
      %p54 = scmp.ne.s32.totalorder %s37, %s53
      %p55 = scmp.eq.s32.totalorder %s29, 0
      %p56 = por %p54, %p55
      %s58 = sadd.s32 %s57, 1
      %p61 = scmp.eq.s32.totalorder %s23, 1
      %p62 = scmp.ne.s32.totalorder %s57, %s59
      %p63 = scmp.eq.s32.totalorder %s23, 0
      %p64 = por %p62, %p63
      %p65 = scmp.ne.s32.totalorder %s57, %s59
      %p66 = scmp.eq.s32.totalorder %s28, 1
      %p67 = por %p65, %p66
      %p68 = scmp.ne.s32.totalorder %s59, %s60
      %p69 = scmp.eq.s32.totalorder %s28, 0
      %p70 = por %p68, %p69
      %p71 = scmp.ne.s32.totalorder %s59, %s60
      %p72 = scmp.eq.s32.totalorder %s29, 1
      %p73 = por %p71, %p72
      %p75 = scmp.ne.s32.totalorder %s60, %s74
      %p76 = scmp.eq.s32.totalorder %s29, 0
      %p77 = por %p75, %p76
      %s79 = sadd.s32 %s78, 1
      %p82 = scmp.eq.s32.totalorder %s23, 1
      %p83 = scmp.ne.s32.totalorder %s78, %s80
      %p84 = scmp.eq.s32.totalorder %s23, 0
      %p85 = por %p83, %p84
      %p86 = scmp.ne.s32.totalorder %s78, %s80
      %p87 = scmp.eq.s32.totalorder %s28, 1
      %p88 = por %p86, %p87
      %p89 = scmp.ne.s32.totalorder %s80, %s81
      %p90 = scmp.eq.s32.totalorder %s28, 0
      %p91 = por %p89, %p90
      %p92 = scmp.ne.s32.totalorder %s80, %s81
      %p93 = scmp.eq.s32.totalorder %s29, 1
      %p94 = por %p92, %p93
      %p96 = scmp.ne.s32.totalorder %s81, %s95
      %p97 = scmp.eq.s32.totalorder %s29, 0
      %p98 = por %p96, %p97
      %s100 = sadd.s32 %s99, 1
      %p103 = scmp.eq.s32.totalorder %s23, 1
      %p104 = scmp.ne.s32.totalorder %s99, %s101
      %p105 = scmp.eq.s32.totalorder %s23, 0
      %p106 = por %p104, %p105
      %p107 = scmp.ne.s32.totalorder %s99, %s101
      %p108 = scmp.eq.s32.totalorder %s28, 1
      %p109 = por %p107, %p108
      %p110 = scmp.ne.s32.totalorder %s101, %s102
      %p111 = scmp.eq.s32.totalorder %s28, 0
      %p112 = por %p110, %p111
      %p113 = scmp.ne.s32.totalorder %s101, %s102
      %p114 = scmp.eq.s32.totalorder %s29, 1
      %p115 = por %p113, %p114
      %p117 = scmp.ne.s32.totalorder %s102, %s116
      %p118 = scmp.eq.s32.totalorder %s29, 0
      %p119 = por %p117, %p118
      %s121 = sadd.s32 %s120, 1
      %p124 = scmp.eq.s32.totalorder %s23, 1
      %p125 = scmp.ne.s32.totalorder %s120, %s122
      %p126 = scmp.eq.s32.totalorder %s23, 0
      %p127 = por %p125, %p126
      %p128 = scmp.ne.s32.totalorder %s120, %s122
      %p129 = scmp.eq.s32.totalorder %s28, 1
      %p130 = por %p128, %p129
      %p131 = scmp.ne.s32.totalorder %s122, %s123
      %p132 = scmp.eq.s32.totalorder %s28, 0
      %p133 = por %p131, %p132
      %p134 = scmp.ne.s32.totalorder %s122, %s123
      %p135 = scmp.eq.s32.totalorder %s29, 1
      %p136 = por %p134, %p135
      %p138 = scmp.ne.s32.totalorder %s123, %s137
      %p139 = scmp.eq.s32.totalorder %s29, 0
      %p140 = por %p138, %p139
      %s142 = sadd.s32 %s141, 1
      %p145 = scmp.eq.s32.totalorder %s23, 1
      %p146 = scmp.ne.s32.totalorder %s141, %s143
      %p147 = scmp.eq.s32.totalorder %s23, 0
      %p148 = por %p146, %p147
      %p149 = scmp.ne.s32.totalorder %s141, %s143
      %p150 = scmp.eq.s32.totalorder %s28, 1
      %p151 = por %p149, %p150
      %p152 = scmp.ne.s32.totalorder %s143, %s144
      %p153 = scmp.eq.s32.totalorder %s28, 0
      %p154 = por %p152, %p153
      %p155 = scmp.ne.s32.totalorder %s143, %s144
      %p156 = scmp.eq.s32.totalorder %s29, 1
      %p157 = por %p155, %p156
      %p159 = scmp.ne.s32.totalorder %s144, %s158
      %p160 = scmp.eq.s32.totalorder %s29, 0
      %p161 = por %p159, %p160
      %s163 = sadd.s32 %s162, 1
      %p166 = scmp.eq.s32.totalorder %s23, 1
      %p167 = scmp.ne.s32.totalorder %s162, %s164
      %p168 = scmp.eq.s32.totalorder %s23, 0
      %p169 = por %p167, %p168
      %p170 = scmp.ne.s32.totalorder %s162, %s164
      %p171 = scmp.eq.s32.totalorder %s28, 1
      %p172 = por %p170, %p171
      %p173 = scmp.ne.s32.totalorder %s164, %s165
      %p174 = scmp.eq.s32.totalorder %s28, 0
      %p175 = por %p173, %p174
      %p176 = scmp.ne.s32.totalorder %s164, %s165
      %p177 = scmp.eq.s32.totalorder %s29, 1
      %p178 = por %p176, %p177
      %p180 = scmp.ne.s32.totalorder %s165, %s179
      %p181 = scmp.eq.s32.totalorder %s29, 0
      %p182 = por %p180, %p181
      %s184 = sadd.s32 %s183, 1
      %p187 = scmp.eq.s32.totalorder %s23, 1
      %p188 = scmp.ne.s32.totalorder %s183, %s185
      %p189 = scmp.eq.s32.totalorder %s23, 0
      %p190 = por %p188, %p189
      %p191 = scmp.ne.s32.totalorder %s183, %s185
      %p192 = scmp.eq.s32.totalorder %s28, 1
      %p193 = por %p191, %p192
      %p194 = scmp.ne.s32.totalorder %s185, %s186
      %p195 = scmp.eq.s32.totalorder %s28, 0
      %p196 = por %p194, %p195
      %p197 = scmp.ne.s32.totalorder %s185, %s186
      %p198 = scmp.eq.s32.totalorder %s29, 1
      %p199 = por %p197, %p198
      %p201 = scmp.ne.s32.totalorder %s186, %s200
      %p202 = scmp.eq.s32.totalorder %s29, 0
      %p203 = por %p201, %p202
      %s205 = sadd.s32 %s204, 1
      %p208 = scmp.eq.s32.totalorder %s23, 1
      %p209 = scmp.ne.s32.totalorder %s204, %s206
      %p210 = scmp.eq.s32.totalorder %s23, 0
      %p211 = por %p209, %p210
      %p212 = scmp.ne.s32.totalorder %s204, %s206
      %p213 = scmp.eq.s32.totalorder %s28, 1
      %p214 = por %p212, %p213
      %p215 = scmp.ne.s32.totalorder %s206, %s207
      %p216 = scmp.eq.s32.totalorder %s28, 0
      %p217 = por %p215, %p216
      %p218 = scmp.ne.s32.totalorder %s206, %s207
      %p219 = scmp.eq.s32.totalorder %s29, 1
      %p220 = por %p218, %p219
      %p222 = scmp.ne.s32.totalorder %s207, %s221
      %p223 = scmp.eq.s32.totalorder %s29, 0
      %p224 = por %p222, %p223
      %s226 = sadd.s32 %s225, 1
      %p229 = scmp.eq.s32.totalorder %s23, 1
      %p230 = scmp.ne.s32.totalorder %s225, %s227
      %p231 = scmp.eq.s32.totalorder %s23, 0
      %p232 = por %p230, %p231
      %p233 = scmp.ne.s32.totalorder %s225, %s227
      %p234 = scmp.eq.s32.totalorder %s28, 1
      %p235 = por %p233, %p234
      %p236 = scmp.ne.s32.totalorder %s227, %s228
      %p237 = scmp.eq.s32.totalorder %s28, 0
      %p238 = por %p236, %p237
      %p239 = scmp.ne.s32.totalorder %s227, %s228
      %p240 = scmp.eq.s32.totalorder %s29, 1
      %p241 = por %p239, %p240
      %p243 = scmp.ne.s32.totalorder %s228, %s242
      %p244 = scmp.eq.s32.totalorder %s29, 0
      %p245 = por %p243, %p244
      %s247 = sadd.s32 %s246, 1
      %p250 = scmp.eq.s32.totalorder %s23, 1
      %p251 = scmp.ne.s32.totalorder %s246, %s248
      %p252 = scmp.eq.s32.totalorder %s23, 0
      %p253 = por %p251, %p252
      %p254 = scmp.ne.s32.totalorder %s246, %s248
      %p255 = scmp.eq.s32.totalorder %s28, 1
      %p256 = por %p254, %p255
      %p257 = scmp.ne.s32.totalorder %s248, %s249
      %p258 = scmp.eq.s32.totalorder %s28, 0
      %p259 = por %p257, %p258
      %p260 = scmp.ne.s32.totalorder %s248, %s249
      %p261 = scmp.eq.s32.totalorder %s29, 1
      %p262 = por %p260, %p261
      %p264 = scmp.ne.s32.totalorder %s249, %s263
      %p265 = scmp.eq.s32.totalorder %s29, 0
      %p266 = por %p264, %p265
      %s268 = sadd.s32 %s267, 1
      %p271 = scmp.eq.s32.totalorder %s23, 1
      %p272 = scmp.ne.s32.totalorder %s267, %s269
      %p273 = scmp.eq.s32.totalorder %s23, 0
      %p274 = por %p272, %p273
      %p275 = scmp.ne.s32.totalorder %s267, %s269
      %p276 = scmp.eq.s32.totalorder %s28, 1
      %p277 = por %p275, %p276
      %p278 = scmp.ne.s32.totalorder %s269, %s270
      %p279 = scmp.eq.s32.totalorder %s28, 0
      %p280 = por %p278, %p279
      %p281 = scmp.ne.s32.totalorder %s269, %s270
      %p282 = scmp.eq.s32.totalorder %s29, 1
      %p283 = por %p281, %p282
      %p285 = scmp.ne.s32.totalorder %s270, %s284
      %p286 = scmp.eq.s32.totalorder %s29, 0
      %p287 = por %p285, %p286
      %s289 = sadd.s32 %s288, 1
      %p292 = scmp.eq.s32.totalorder %s23, 1
      %p293 = scmp.ne.s32.totalorder %s288, %s290
      %p294 = scmp.eq.s32.totalorder %s23, 0
      %p295 = por %p293, %p294
      %p296 = scmp.ne.s32.totalorder %s288, %s290
      %p297 = scmp.eq.s32.totalorder %s28, 1
      %p298 = por %p296, %p297
      %p299 = scmp.ne.s32.totalorder %s290, %s291
      %p300 = scmp.eq.s32.totalorder %s28, 0
      %p301 = por %p299, %p300
      %p302 = scmp.ne.s32.totalorder %s290, %s291
      %p303 = scmp.eq.s32.totalorder %s29, 1
      %p304 = por %p302, %p303
      %p306 = scmp.ne.s32.totalorder %s291, %s305
      %p307 = scmp.eq.s32.totalorder %s29, 0
      %p308 = por %p306, %p307
      %s309 = ssub.s32 %s23, %s30
      %p310 = scmp.eq.s32.totalorder %s309, 0
      %s312 = sadd.s32 %s311, 1
      %s313 = scalar_select %p310, %s311, %s312
      %p316 = pneg %p310
      %p317 = scmp.eq.s32.totalorder %s23, 1
      %p318 = por %p316, %p317
      %p319 = scmp.ne.s32.totalorder %s311, %s314
      %p320 = scmp.eq.s32.totalorder %s23, 0
      %p321 = por %p319, %p320
      %p322 = scmp.ne.s32.totalorder %s311, %s314
      %p323 = scmp.eq.s32.totalorder %s28, 1
      %p324 = por %p322, %p323
      %p325 = scmp.ne.s32.totalorder %s314, %s315
      %p326 = scmp.eq.s32.totalorder %s28, 0
      %p327 = por %p325, %p326
      %p328 = scmp.ne.s32.totalorder %s314, %s315
      %p329 = scmp.eq.s32.totalorder %s29, 1
      %p330 = por %p328, %p329
      %p332 = scmp.ne.s32.totalorder %s315, %s331
      %p333 = scmp.eq.s32.totalorder %s29, 0
      %p334 = por %p332, %p333
      %p335 = scmp.le.s32.totalorder 1, %s23
      %p336 = scmp.lt.s32.totalorder %s23, 3
      %p337 = pnand %p335, %p336
      %p338 = pneg %p337
      // Predicated region
      $region9: #{tpu_custom_call.1} parent=5 // pred_check
        _
      $region10: #{tpu_custom_call.1} parent=5 // pred_check_branch
        %340 = sbr.rel (%p337) target = $region12
      $region11: #{tpu_custom_call.1} parent=5 // pred_region
        %s341 = ssub.s32 %s23, 1
        // Predicated region
        $region13: #{tpu_custom_call.1} parent=11 // pred_check
          %p342 = pneg %p70
        $region14: #{tpu_custom_call.1} parent=11 // pred_check_branch
          %344 = sbr.rel (%p342) target = $region16
        $region15: #{tpu_custom_call.1} parent=11 // pred_region
          _
        $region16: #{tpu_custom_call.1} parent=11 // pred_fallthru
          _
        // Predicated region
        $region17: #{tpu_custom_call.1} parent=11 // pred_check
          %p345 = pneg %p91
        $region18: #{tpu_custom_call.1} parent=11 // pred_check_branch
          %347 = sbr.rel (%p345) target = $region20
        $region19: #{tpu_custom_call.1} parent=11 // pred_region
          %s349 = ssub.s32 16, 16
          %350 = vsyncadd [#allocation4], %s349
          %s352 = sshll.u32 [#allocation3], 4
          %s353 = int_to_ptr.vmem [resolvable:$true] %s352
          %355 = dma.hbm_to_vmem [thread:$0]  %s2, 16, %s353, [#allocation4]
        $region20: #{tpu_custom_call.1} parent=11 // pred_fallthru
          _
        // Predicated region
        $region21: #{tpu_custom_call.1} parent=11 // pred_check
          %p356 = pneg %p112
        $region22: #{tpu_custom_call.1} parent=11 // pred_check_branch
          %358 = sbr.rel (%p356) target = $region24
        $region23: #{tpu_custom_call.1} parent=11 // pred_region
          _
        $region24: #{tpu_custom_call.1} parent=11 // pred_fallthru
          _
        // Predicated region
        $region25: #{tpu_custom_call.1} parent=11 // pred_check
          %p359 = pneg %p133
        $region26: #{tpu_custom_call.1} parent=11 // pred_check_branch
          %361 = sbr.rel (%p359) target = $region28
        $region27: #{tpu_custom_call.1} parent=11 // pred_region
          _
        $region28: #{tpu_custom_call.1} parent=11 // pred_fallthru
          _
        // Predicated region
        $region29: #{tpu_custom_call.1} parent=11 // pred_check
          %p362 = pneg %p154
        $region30: #{tpu_custom_call.1} parent=11 // pred_check_branch
          %364 = sbr.rel (%p362) target = $region32
        $region31: #{tpu_custom_call.1} parent=11 // pred_region
          _
        $region32: #{tpu_custom_call.1} parent=11 // pred_fallthru
          _
        // Predicated region
        $region33: #{tpu_custom_call.1} parent=11 // pred_check
          %p365 = pneg %p175
        $region34: #{tpu_custom_call.1} parent=11 // pred_check_branch
          %367 = sbr.rel (%p365) target = $region36
        $region35: #{tpu_custom_call.1} parent=11 // pred_region
          _
        $region36: #{tpu_custom_call.1} parent=11 // pred_fallthru
          _
        // Predicated region
        $region37: #{tpu_custom_call.1} parent=11 // pred_check
          %p368 = pneg %p196
        $region38: #{tpu_custom_call.1} parent=11 // pred_check_branch
          %370 = sbr.rel (%p368) target = $region40
        $region39: #{tpu_custom_call.1} parent=11 // pred_region
          _
        $region40: #{tpu_custom_call.1} parent=11 // pred_fallthru
          _
        // Predicated region
        $region41: #{tpu_custom_call.1} parent=11 // pred_check
          %p371 = pneg %p217
        $region42: #{tpu_custom_call.1} parent=11 // pred_check_branch
          %373 = sbr.rel (%p371) target = $region44
        $region43: #{tpu_custom_call.1} parent=11 // pred_region
          _
        $region44: #{tpu_custom_call.1} parent=11 // pred_fallthru
          _
        // Predicated region
        $region45: #{tpu_custom_call.1} parent=11 // pred_check
          %p374 = pneg %p238
        $region46: #{tpu_custom_call.1} parent=11 // pred_check_branch
          %376 = sbr.rel (%p374) target = $region48
        $region47: #{tpu_custom_call.1} parent=11 // pred_region
          _
        $region48: #{tpu_custom_call.1} parent=11 // pred_fallthru
          _
        // Predicated region
        $region49: #{tpu_custom_call.1} parent=11 // pred_check
          %p377 = pneg %p259
        $region50: #{tpu_custom_call.1} parent=11 // pred_check_branch
          %379 = sbr.rel (%p377) target = $region52
        $region51: #{tpu_custom_call.1} parent=11 // pred_region
          _
        $region52: #{tpu_custom_call.1} parent=11 // pred_fallthru
          _
        // Predicated region
        $region53: #{tpu_custom_call.1} parent=11 // pred_check
          %p380 = pneg %p280
        $region54: #{tpu_custom_call.1} parent=11 // pred_check_branch
          %382 = sbr.rel (%p380) target = $region56
        $region55: #{tpu_custom_call.1} parent=11 // pred_region
          _
        $region56: #{tpu_custom_call.1} parent=11 // pred_fallthru
          _
        // Predicated region
        $region57: #{tpu_custom_call.1} parent=11 // pred_check
          %p383 = pneg %p301
        $region58: #{tpu_custom_call.1} parent=11 // pred_check_branch
          %385 = sbr.rel (%p383) target = $region60
        $region59: #{tpu_custom_call.1} parent=11 // pred_region
          _
        $region60: #{tpu_custom_call.1} parent=11 // pred_fallthru
          _
      $region12: #{tpu_custom_call.1} parent=5 // pred_fallthru
        _
      %p386 = scmp.lt.s32.totalorder %s23, 2
      // Predicated region
      $region61: #{tpu_custom_call.1} parent=5 // pred_check
        %p387 = pneg %p386
      $region62: #{tpu_custom_call.1} parent=5 // pred_check_branch
        %389 = sbr.rel (%p387) target = $region64
      $region63: #{tpu_custom_call.1} parent=5 // pred_region
        // Predicated region
        $region65: #{tpu_custom_call.1} parent=63 // pred_check
          %p390 = pneg %p43
        $region66: #{tpu_custom_call.1} parent=63 // pred_check_branch
          %392 = sbr.rel (%p390) target = $region68
        $region67: #{tpu_custom_call.1} parent=63 // pred_region
          %p393 = scmp.lt.s32.totalorder %s23, 1
          %s394 = scalar_select %p393, %s23, 1
          %s395 = smul.addr %s394, 8
          %s396 = scalar_lea.vmem %s0, %s395
        $region68: #{tpu_custom_call.1} parent=63 // pred_fallthru
          _
      $region64: #{tpu_custom_call.1} parent=5 // pred_fallthru
        _
      %p397 = scmp.le.s32.totalorder 1, %s23
      %p398 = scmp.lt.s32.totalorder %s23, 3
      %p399 = pnand %p397, %p398
      %p400 = pneg %p399
      // Predicated region
      $region69: #{tpu_custom_call.1} parent=5 // pred_check
        _
      $region70: #{tpu_custom_call.1} parent=5 // pred_check_branch
        %402 = sbr.rel (%p399) target = $region72
      $region71: #{tpu_custom_call.1} parent=5 // pred_region
        %s403 = ssub.s32 %s23, 1
        // Predicated region
        $region73: #{tpu_custom_call.1} parent=71 // pred_check
          %p404 = pneg %p91
        $region74: #{tpu_custom_call.1} parent=71 // pred_check_branch
          %406 = sbr.rel (%p404) target = $region76
        $region75: #{tpu_custom_call.1} parent=71 // pred_region
          %407 = dma.done [#allocation4], 16
        $region76: #{tpu_custom_call.1} parent=71 // pred_fallthru
          _
        %p408 = scmp.lt.s32.totalorder %s28, 1
        %s409 = scalar_select %p408, %s28, 1
        %s410 = smul.addr %s409, 8
        %s411 = scalar_lea.vmem %s0, %s410
        %p412 = pneg %p49
        %p413 = pneg %p46
        %p414 = pneg %p70
        %p415 = pneg %p67
        %p416 = pneg %p91
        %p417 = pneg %p88
        %p418 = pneg %p112
        %p419 = pneg %p109
        %p420 = pneg %p133
        %p421 = pneg %p130
        %p422 = pneg %p154
        %p423 = pneg %p151
        %p424 = pneg %p175
        %p425 = pneg %p172
        %p426 = pneg %p196
        %p427 = pneg %p193
        %p428 = pneg %p217
        %p429 = pneg %p214
        %p430 = pneg %p238
        %p431 = pneg %p235
        %p432 = pneg %p259
        %p433 = pneg %p256
        %p434 = pneg %p280
        %p435 = pneg %p277
        %p436 = pneg %p301
        %p437 = pneg %p298
        %p438 = pneg %p327
        %p439 = pneg %p324
        %s440 = sand.u32 %s314, 1
        %s441 = scalar_lea.sflag [#allocation5], %s440
        %s442 = sand.u32 %s314, 1
        %s443 = smul.addr %s442, 8
        %s444 = scalar_lea.vmem [#allocation6], %s443
        %p445 = scmp.lt.s32.totalorder %s28, 1
        %s446 = scalar_select %p445, %s28, 1
        %s447 = smul.addr %s446, 8
        %s448 = scalar_lea.vmem %s0, %s447
        %v449 = vld [vmem:[%s448] sm:$0xff]
        %v450 = vlaneseq
        %v451 = vand.u32 %v450, 127
        %vm452 = vcmp.lt.s32.totalorder %v451, 32
        %v453 = vld [vmem:[%s1] sm:$0x1]
        %v454 = vld [vmem:[#allocation3] sm:$0x1]
        %455 = vadd.xlane.f32.xlu0 %v449
        %v456 = vpop.xlane.xlu0 %455
        %v457 = vmul.f32 %v456, 0.03125
        %v458 = vsub.f32 %v449, %v457
        %v459 = vsel %vm452, 1, 0
        %vm460 = vcmp.eq.s32.totalorder %v459, 1
        %v461 = vsel %vm460, %v458, 0.0
        %v462 = vmul.f32 %v461, %v461
        %463 = vadd.xlane.f32.xlu0 %v462
        %v464 = vpop.xlane.xlu0 %463
        %v465 = vmul.f32 %v464, 0.03125
        %v466 = vadd.f32 %v465, 1e-05
        %v467 = vrsqrt.pop %v466
        %v468 = vmul.f32 %v461, %v467
        %v470 = vlaneseq
        %v471 = vshrl.u32 %v470, 7
        %v472 = vsub.s32 0, %v471
        %v473 = vrot.slane %v453, %v472
        %v475 = vmul.f32 %v468, %v473
        %v477 = vlaneseq
        %v478 = vshrl.u32 %v477, 7
        %v479 = vsub.s32 0, %v478
        %v480 = vrot.slane %v454, %v479
        %v482 = vadd.f32 %v475, %v480
        %v483 = vld [vmem:[%s3] sm:$0xff]
        %v484 = vld [vmem:[%s3 + $0x8] sm:$0xff]
        %v485 = vld [vmem:[%s3 + $0x10] sm:$0xff]
        %v486 = vld [vmem:[%s3 + $0x18] sm:$0xff]
        %v487 = vld [vmem:[%s3 + $0x20] sm:$0xff]
        %v488 = vld [vmem:[%s3 + $0x28] sm:$0xff]
        %v489 = vld [vmem:[%s3 + $0x30] sm:$0xff]
        %v490 = vld [vmem:[%s3 + $0x38] sm:$0xff]
        %v491 = vld [vmem:[%s3 + $0x40] sm:$0xff]
        %v492 = vld [vmem:[%s3 + $0x48] sm:$0xff]
        %v493 = vld [vmem:[%s3 + $0x50] sm:$0xff]
        %v494 = vld [vmem:[%s3 + $0x58] sm:$0xff]
        %v495 = vld [vmem:[%s3 + $0x60] sm:$0xff]
        %v496 = vld [vmem:[%s3 + $0x68] sm:$0xff]
        %v497 = vld [vmem:[%s3 + $0x70] sm:$0xff]
        %v498 = vld [vmem:[%s3 + $0x78] sm:$0xff]
        %v499 = vld [vmem:[%s4] sm:$0xff]
        %v500 = vld [vmem:[%s4 + $0x8] sm:$0xff]
        %v501 = vld [vmem:[%s4 + $0x10] sm:$0xff]
        %v502 = vld [vmem:[%s4 + $0x18] sm:$0xff]
        %v503 = vld [vmem:[%s4 + $0x20] sm:$0xff]
        %v504 = vld [vmem:[%s4 + $0x28] sm:$0xff]
        %v505 = vld [vmem:[%s4 + $0x30] sm:$0xff]
        %v506 = vld [vmem:[%s4 + $0x38] sm:$0xff]
        %v507 = vld [vmem:[%s4 + $0x40] sm:$0xff]
        %v508 = vld [vmem:[%s4 + $0x48] sm:$0xff]
        %v509 = vld [vmem:[%s4 + $0x50] sm:$0xff]
        %v510 = vld [vmem:[%s4 + $0x58] sm:$0xff]
        %v511 = vld [vmem:[%s4 + $0x60] sm:$0xff]
        %v512 = vld [vmem:[%s4 + $0x68] sm:$0xff]
        %v513 = vld [vmem:[%s4 + $0x70] sm:$0xff]
        %v514 = vld [vmem:[%s4 + $0x78] sm:$0xff]
        %v515 = vld [vmem:[%s5] sm:$0xff]
        %v516 = vld [vmem:[%s6] sm:$0xff]
        %518 = vset.pattern.permute.xlu0 0
        %519 = vperm.xlu0 %518, %v499
        %v520 = vpop.permute.xlu0 %519
        %523 = vset.pattern.permute.xlu0 0
        %524 = vperm.xlu0 %523, %v500
        %v525 = vpop.permute.xlu0 %524
        %528 = vset.pattern.permute.xlu0 0
        %529 = vperm.xlu0 %528, %v501
        %v530 = vpop.permute.xlu0 %529
        %533 = vset.pattern.permute.xlu0 0
        %534 = vperm.xlu0 %533, %v502
        %v535 = vpop.permute.xlu0 %534
        %538 = vset.pattern.permute.xlu0 0
        %539 = vperm.xlu0 %538, %v503
        %v540 = vpop.permute.xlu0 %539
        %543 = vset.pattern.permute.xlu0 0
        %544 = vperm.xlu0 %543, %v504
        %v545 = vpop.permute.xlu0 %544
        %548 = vset.pattern.permute.xlu0 0
        %549 = vperm.xlu0 %548, %v505
        %v550 = vpop.permute.xlu0 %549
        %553 = vset.pattern.permute.xlu0 0
        %554 = vperm.xlu0 %553, %v506
        %v555 = vpop.permute.xlu0 %554
        %558 = vset.pattern.permute.xlu0 0
        %559 = vperm.xlu0 %558, %v507
        %v560 = vpop.permute.xlu0 %559
        %563 = vset.pattern.permute.xlu0 0
        %564 = vperm.xlu0 %563, %v508
        %v565 = vpop.permute.xlu0 %564
        %568 = vset.pattern.permute.xlu0 0
        %569 = vperm.xlu0 %568, %v509
        %v570 = vpop.permute.xlu0 %569
        %573 = vset.pattern.permute.xlu0 0
        %574 = vperm.xlu0 %573, %v510
        %v575 = vpop.permute.xlu0 %574
        %578 = vset.pattern.permute.xlu0 0
        %579 = vperm.xlu0 %578, %v511
        %v580 = vpop.permute.xlu0 %579
        %583 = vset.pattern.permute.xlu0 0
        %584 = vperm.xlu0 %583, %v512
        %v585 = vpop.permute.xlu0 %584
        %588 = vset.pattern.permute.xlu0 0
        %589 = vperm.xlu0 %588, %v513
        %v590 = vpop.permute.xlu0 %589
        %593 = vset.pattern.permute.xlu0 0
        %594 = vperm.xlu0 %593, %v514
        %v595 = vpop.permute.xlu0 %594
        %vm597 = vcmask 64512
        %v599 = vsel %vm597, %v483, 0
        %v602 = vsel %vm597, %v484, 0
        %v605 = vsel %vm597, %v485, 0
        %v608 = vsel %vm597, %v486, 0
        %v611 = vsel %vm597, %v487, 0
        %v614 = vsel %vm597, %v488, 0
        %v617 = vsel %vm597, %v489, 0
        %v620 = vsel %vm597, %v490, 0
        %v623 = vsel %vm597, %v491, 0
        %v626 = vsel %vm597, %v492, 0
        %v629 = vsel %vm597, %v493, 0
        %v632 = vsel %vm597, %v494, 0
        %v635 = vsel %vm597, %v495, 0
        %v638 = vsel %vm597, %v496, 0
        %v641 = vsel %vm597, %v497, 0
        %v644 = vsel %vm597, %v498, 0
        %646 = vmatprep.subr.mxu0 0.0
        %647 = vmatpush1.msra.mxu0 0.0
        %648 = vmatprep.subr.mxu0 0.0
        %649 = vmatpush1.msra.mxu0 0.0
        %650 = vmatprep.subr.mxu0 0.0
        %651 = vmatpush1.msra.mxu0 0.0
        %652 = vmatprep.subr.mxu0 0.0
        %653 = vmatpush1.msra.mxu0 0.0
        %654 = vmatprep.subr.mxu0 0.0
        %655 = vmatpush1.msra.mxu0 0.0
        %656 = vmatprep.subr.mxu0 0.0
        %657 = vmatpush1.msra.mxu0 0.0
        %658 = vmatprep.subr.mxu0 0.0
        %659 = vmatpush1.msra.mxu0 0.0
        %660 = vmatprep.subr.mxu0 0.0
        %661 = vmatpush1.msra.mxu0 0.0
        %662 = vmatprep.subr.mxu0 0.0
        %663 = vmatpush1.msra.mxu0 0.0
        %664 = vmatprep.subr.mxu0 0.0
        %665 = vmatpush1.msra.mxu0 0.0
        %666 = vmatprep.subr.mxu0 0.0
        %667 = vmatpush1.msra.mxu0 0.0
        %668 = vmatprep.subr.mxu0 0.0
        %669 = vmatpush1.msra.mxu0 0.0
        %670 = vmatprep.subr.mxu0 0.0
        %671 = vmatpush1.msra.mxu0 0.0
        %672 = vmatprep.subr.mxu0 0.0
        %673 = vmatpush1.msra.mxu0 0.0
        %674 = vmatprep.subr.mxu0 0.0
        %675 = vmatpush1.msra.mxu0 0.0
        %676 = vmatprep.subr.mxu0 0.0
        %677 = vmatpush1.msra.mxu0 %v482
        %678 = vmatprep.subr.mxu0 0.0
        %679 = vmatpush2.msra.mxu0 0.0
        %680 = vmatprep.subr.mxu0 0.0
        %681 = vmatpush2.msra.mxu0 0.0
        %682 = vmatprep.subr.mxu0 0.0
        %683 = vmatpush2.msra.mxu0 0.0
        %684 = vmatprep.subr.mxu0 0.0
        %685 = vmatpush2.msra.mxu0 0.0
        %686 = vmatprep.subr.mxu0 0.0
        %687 = vmatpush2.msra.mxu0 0.0
        %688 = vmatprep.subr.mxu0 0.0
        %689 = vmatpush2.msra.mxu0 0.0
        %690 = vmatprep.subr.mxu0 0.0
        %691 = vmatpush2.msra.mxu0 0.0
        %692 = vmatprep.subr.mxu0 0.0
        %693 = vmatpush2.msra.mxu0 0.0
        %694 = vmatprep.subr.mxu0 0.0
        %695 = vmatpush2.msra.mxu0 0.0
        %696 = vmatprep.subr.mxu0 0.0
        %697 = vmatpush2.msra.mxu0 0.0
        %698 = vmatprep.subr.mxu0 0.0
        %699 = vmatpush2.msra.mxu0 0.0
        %700 = vmatprep.subr.mxu0 0.0
        %701 = vmatpush2.msra.mxu0 0.0
        %702 = vmatprep.subr.mxu0 0.0
        %703 = vmatpush2.msra.mxu0 0.0
        %704 = vmatprep.subr.mxu0 0.0
        %705 = vmatpush2.msra.mxu0 0.0
        %706 = vmatprep.subr.mxu0 0.0
        %707 = vmatpush2.msra.mxu0 0.0
        %708 = vmatprep.subr.mxu0 0.0
        %709 = vmatpush2.msra.mxu0 0.0
        %710 = vmatprep.mubr.f32.mxu0 0.0
        %711 = vmatmul.mubr.f32.gmra.mxu0 %v599
        %v712 = vpop.f32.mrf.mxu0
        %v713 = vadd.f32 %v520, %v712
        %v714 = vpop.f32.mrf.mxu0
        %715 = vmatprep.mubr.f32.mxu0 0.0
        %716 = vmatmul.mubr.f32.gmra.mxu0 %v602
        %v717 = vpop.f32.mrf.mxu0
        %v718 = vadd.f32 %v525, %v717
        %v719 = vpop.f32.mrf.mxu0
        %720 = vmatprep.mubr.f32.mxu0 0.0
        %721 = vmatmul.mubr.f32.gmra.mxu0 %v605
        %v722 = vpop.f32.mrf.mxu0
        %v723 = vadd.f32 %v530, %v722
        %v724 = vpop.f32.mrf.mxu0
        %725 = vmatprep.mubr.f32.mxu0 0.0
        %726 = vmatmul.mubr.f32.gmra.mxu0 %v608
        %v727 = vpop.f32.mrf.mxu0
        %v728 = vadd.f32 %v535, %v727
        %v729 = vpop.f32.mrf.mxu0
        %730 = vmatprep.mubr.f32.mxu0 0.0
        %731 = vmatmul.mubr.f32.gmra.mxu0 %v611
        %v732 = vpop.f32.mrf.mxu0
        %v733 = vadd.f32 %v540, %v732
        %v734 = vpop.f32.mrf.mxu0
        %735 = vmatprep.mubr.f32.mxu0 0.0
        %736 = vmatmul.mubr.f32.gmra.mxu0 %v614
        %v737 = vpop.f32.mrf.mxu0
        %v738 = vadd.f32 %v545, %v737
        %v739 = vpop.f32.mrf.mxu0
        %740 = vmatprep.mubr.f32.mxu0 0.0
        %741 = vmatmul.mubr.f32.gmra.mxu0 %v617
        %v742 = vpop.f32.mrf.mxu0
        %v743 = vadd.f32 %v550, %v742
        %v744 = vpop.f32.mrf.mxu0
        %745 = vmatprep.mubr.f32.mxu0 0.0
        %746 = vmatmul.mubr.f32.gmra.mxu0 %v620
        %v747 = vpop.f32.mrf.mxu0
        %v748 = vadd.f32 %v555, %v747
        %v749 = vpop.f32.mrf.mxu0
        %750 = vmatprep.mubr.f32.mxu0 0.0
        %751 = vmatmul.mubr.f32.gmra.mxu0 %v623
        %v752 = vpop.f32.mrf.mxu0
        %v753 = vadd.f32 %v560, %v752
        %v754 = vpop.f32.mrf.mxu0
        %755 = vmatprep.mubr.f32.mxu0 0.0
        %756 = vmatmul.mubr.f32.gmra.mxu0 %v626
        %v757 = vpop.f32.mrf.mxu0
        %v758 = vadd.f32 %v565, %v757
        %v759 = vpop.f32.mrf.mxu0
        %760 = vmatprep.mubr.f32.mxu0 0.0
        %761 = vmatmul.mubr.f32.gmra.mxu0 %v629
        %v762 = vpop.f32.mrf.mxu0
        %v763 = vadd.f32 %v570, %v762
        %v764 = vpop.f32.mrf.mxu0
        %765 = vmatprep.mubr.f32.mxu0 0.0
        %766 = vmatmul.mubr.f32.gmra.mxu0 %v632
        %v767 = vpop.f32.mrf.mxu0
        %v768 = vadd.f32 %v575, %v767
        %v769 = vpop.f32.mrf.mxu0
        %770 = vmatprep.mubr.f32.mxu0 0.0
        %771 = vmatmul.mubr.f32.gmra.mxu0 %v635
        %v772 = vpop.f32.mrf.mxu0
        %v773 = vadd.f32 %v580, %v772
        %v774 = vpop.f32.mrf.mxu0
        %775 = vmatprep.mubr.f32.mxu0 0.0
        %776 = vmatmul.mubr.f32.gmra.mxu0 %v638
        %v777 = vpop.f32.mrf.mxu0
        %v778 = vadd.f32 %v585, %v777
        %v779 = vpop.f32.mrf.mxu0
        %780 = vmatprep.mubr.f32.mxu0 0.0
        %781 = vmatmul.mubr.f32.gmra.mxu0 %v641
        %v782 = vpop.f32.mrf.mxu0
        %v783 = vadd.f32 %v590, %v782
        %v784 = vpop.f32.mrf.mxu0
        %785 = vmatprep.mubr.f32.mxu0 0.0
        %786 = vmatmul.mubr.f32.gmra.mxu0 %v644
        %v787 = vpop.f32.mrf.mxu0
        %v788 = vadd.f32 %v595, %v787
        %v789 = vpop.f32.mrf.mxu0
        %790 = vdwg.mxu0
        %v791 = vmul.f32 %v713, 0.5
        %v792 = vmul.f32 %v718, 0.5
        %v793 = vmul.f32 %v723, 0.5
        %v794 = vmul.f32 %v728, 0.5
        %v795 = vmul.f32 %v733, 0.5
        %v796 = vmul.f32 %v738, 0.5
        %v797 = vmul.f32 %v743, 0.5
        %v798 = vmul.f32 %v748, 0.5
        %v799 = vmul.f32 %v753, 0.5
        %v800 = vmul.f32 %v758, 0.5
        %v801 = vmul.f32 %v763, 0.5
        %v802 = vmul.f32 %v768, 0.5
        %v803 = vmul.f32 %v773, 0.5
        %v804 = vmul.f32 %v778, 0.5
        %v805 = vmul.f32 %v783, 0.5
        %v806 = vmul.f32 %v788, 0.5
        %v807 = vmul.f32 %v713, 0.70710677
        %v808 = vmul.f32 %v718, 0.70710677
        %v809 = vmul.f32 %v723, 0.70710677
        %v810 = vmul.f32 %v728, 0.70710677
        %v811 = vmul.f32 %v733, 0.70710677
        %v812 = vmul.f32 %v738, 0.70710677
        %v813 = vmul.f32 %v743, 0.70710677
        %v814 = vmul.f32 %v748, 0.70710677
        %v815 = vmul.f32 %v753, 0.70710677
        %v816 = vmul.f32 %v758, 0.70710677
        %v817 = vmul.f32 %v763, 0.70710677
        %v818 = vmul.f32 %v768, 0.70710677
        %v819 = vmul.f32 %v773, 0.70710677
        %v820 = vmul.f32 %v778, 0.70710677
        %v821 = vmul.f32 %v783, 0.70710677
        %v822 = vmul.f32 %v788, 0.70710677
        %v823 = verf.f32.pop %v807
        %v824 = verf.f32.pop %v808
        %v825 = verf.f32.pop %v809
        %v826 = verf.f32.pop %v810
        %v827 = verf.f32.pop %v811
        %v828 = verf.f32.pop %v812
        %v829 = verf.f32.pop %v813
        %v830 = verf.f32.pop %v814
        %v831 = verf.f32.pop %v815
        %v832 = verf.f32.pop %v816
        %v833 = verf.f32.pop %v817
        %v834 = verf.f32.pop %v818
        %v835 = verf.f32.pop %v819
        %v836 = verf.f32.pop %v820
        %v837 = verf.f32.pop %v821
        %v838 = verf.f32.pop %v822
        %v839 = vadd.f32 %v823, 1.0
        %v840 = vadd.f32 %v824, 1.0
        %v841 = vadd.f32 %v825, 1.0
        %v842 = vadd.f32 %v826, 1.0
        %v843 = vadd.f32 %v827, 1.0
        %v844 = vadd.f32 %v828, 1.0
        %v845 = vadd.f32 %v829, 1.0
        %v846 = vadd.f32 %v830, 1.0
        %v847 = vadd.f32 %v831, 1.0
        %v848 = vadd.f32 %v832, 1.0
        %v849 = vadd.f32 %v833, 1.0
        %v850 = vadd.f32 %v834, 1.0
        %v851 = vadd.f32 %v835, 1.0
        %v852 = vadd.f32 %v836, 1.0
        %v853 = vadd.f32 %v837, 1.0
        %v854 = vadd.f32 %v838, 1.0
        %v855 = vmul.f32 %v791, %v839
        %v856 = vmul.f32 %v792, %v840
        %v857 = vmul.f32 %v793, %v841
        %v858 = vmul.f32 %v794, %v842
        %v859 = vmul.f32 %v795, %v843
        %v860 = vmul.f32 %v796, %v844
        %v861 = vmul.f32 %v797, %v845
        %v862 = vmul.f32 %v798, %v846
        %v863 = vmul.f32 %v799, %v847
        %v864 = vmul.f32 %v800, %v848
        %v865 = vmul.f32 %v801, %v849
        %v866 = vmul.f32 %v802, %v850
        %v867 = vmul.f32 %v803, %v851
        %v868 = vmul.f32 %v804, %v852
        %v869 = vmul.f32 %v805, %v853
        %v870 = vmul.f32 %v806, %v854
        %872 = vset.pattern.permute.xlu0 0
        %873 = vperm.xlu0 %872, %v516
        %v874 = vpop.permute.xlu0 %873
        %876 = vmatprep.subr.mxu0 0.0
        %877 = vmatpush1.msra.mxu0 %v870
        %878 = vmatprep.subr.mxu0 0.0
        %879 = vmatpush1.msra.mxu0 %v869
        %880 = vmatprep.subr.mxu0 0.0
        %881 = vmatpush1.msra.mxu0 %v868
        %882 = vmatprep.subr.mxu0 0.0
        %883 = vmatpush1.msra.mxu0 %v867
        %884 = vmatprep.subr.mxu0 0.0
        %885 = vmatpush1.msra.mxu0 %v866
        %886 = vmatprep.subr.mxu0 0.0
        %887 = vmatpush1.msra.mxu0 %v865
        %888 = vmatprep.subr.mxu0 0.0
        %889 = vmatpush1.msra.mxu0 %v864
        %890 = vmatprep.subr.mxu0 0.0
        %891 = vmatpush1.msra.mxu0 %v863
        %892 = vmatprep.subr.mxu0 0.0
        %893 = vmatpush1.msra.mxu0 %v862
        %894 = vmatprep.subr.mxu0 0.0
        %895 = vmatpush1.msra.mxu0 %v861
        %896 = vmatprep.subr.mxu0 0.0
        %897 = vmatpush1.msra.mxu0 %v860
        %898 = vmatprep.subr.mxu0 0.0
        %899 = vmatpush1.msra.mxu0 %v859
        %900 = vmatprep.subr.mxu0 0.0
        %901 = vmatpush1.msra.mxu0 %v858
        %902 = vmatprep.subr.mxu0 0.0
        %903 = vmatpush1.msra.mxu0 %v857
        %904 = vmatprep.subr.mxu0 0.0
        %905 = vmatpush1.msra.mxu0 %v856
        %906 = vmatprep.subr.mxu0 0.0
        %907 = vmatpush1.msra.mxu0 %v855
        %908 = vmatprep.subr.mxu0 0.0
        %909 = vmatpush2.msra.mxu0 0.0
        %910 = vmatprep.subr.mxu0 0.0
        %911 = vmatpush2.msra.mxu0 0.0
        %912 = vmatprep.subr.mxu0 0.0
        %913 = vmatpush2.msra.mxu0 0.0
        %914 = vmatprep.subr.mxu0 0.0
        %915 = vmatpush2.msra.mxu0 0.0
        %916 = vmatprep.subr.mxu0 0.0
        %917 = vmatpush2.msra.mxu0 0.0
        %918 = vmatprep.subr.mxu0 0.0
        %919 = vmatpush2.msra.mxu0 0.0
        %920 = vmatprep.subr.mxu0 0.0
        %921 = vmatpush2.msra.mxu0 0.0
        %922 = vmatprep.subr.mxu0 0.0
        %923 = vmatpush2.msra.mxu0 0.0
        %924 = vmatprep.subr.mxu0 0.0
        %925 = vmatpush2.msra.mxu0 0.0
        %926 = vmatprep.subr.mxu0 0.0
        %927 = vmatpush2.msra.mxu0 0.0
        %928 = vmatprep.subr.mxu0 0.0
        %929 = vmatpush2.msra.mxu0 0.0
        %930 = vmatprep.subr.mxu0 0.0
        %931 = vmatpush2.msra.mxu0 0.0
        %932 = vmatprep.subr.mxu0 0.0
        %933 = vmatpush2.msra.mxu0 0.0
        %934 = vmatprep.subr.mxu0 0.0
        %935 = vmatpush2.msra.mxu0 0.0
        %936 = vmatprep.subr.mxu0 0.0
        %937 = vmatpush2.msra.mxu0 0.0
        %938 = vmatprep.subr.mxu0 0.0
        %939 = vmatpush2.msra.mxu0 0.0
        %940 = vmatprep.mubr.f32.mxu0 0.0
        %941 = vmatmul.mubr.f32.gmra.mxu0 %v515
        %v942 = vpop.f32.mrf.mxu0
        %v943 = vadd.f32 %v874, %v942
        %v944 = vpop.f32.mrf.mxu0
        %945 = vdwg.mxu0
        %v946 = vadd.f32 %v449, %v943
        %947 = vst [vmem:[#allocation2] sm:$0xff] %v946
        %v948 = vld [vmem:[#allocation2] sm:$0xff]
        %v949 = vld [vmem:[%s7] sm:$0x1]
        %v950 = vld [vmem:[%s8] sm:$0x1]
        %v951 = vsel %vm460, %v948, 0.0
        %952 = vadd.xlane.f32.xlu0 %v951
        %v953 = vpop.xlane.xlu0 %952
        %v954 = vmul.f32 %v953, 0.03125
        %v955 = vsub.f32 %v948, %v954
        %v956 = vsel %vm460, %v955, 0.0
        %v957 = vmul.f32 %v956, %v956
        %958 = vadd.xlane.f32.xlu0 %v957
        %v959 = vpop.xlane.xlu0 %958
        %v960 = vmul.f32 %v959, 0.03125
        %v961 = vadd.f32 %v960, 1e-05
        %v962 = vrsqrt.pop %v961
        %v963 = vmul.f32 %v956, %v962
        %v965 = vlaneseq
        %v966 = vshrl.u32 %v965, 7
        %v967 = vsub.s32 0, %v966
        %v968 = vrot.slane %v949, %v967
        %v970 = vmul.f32 %v963, %v968
        %v972 = vlaneseq
        %v973 = vshrl.u32 %v972, 7
        %v974 = vsub.s32 0, %v973
        %v975 = vrot.slane %v950, %v974
        %v977 = vadd.f32 %v970, %v975
        %v978 = vld [vmem:[%s9] sm:$0xff]
        %v979 = vld [vmem:[%s9 + $0x8] sm:$0xff]
        %v980 = vld [vmem:[%s9 + $0x10] sm:$0xff]
        %v981 = vld [vmem:[%s9 + $0x18] sm:$0xff]
        %v982 = vld [vmem:[%s9 + $0x20] sm:$0xff]
        %v983 = vld [vmem:[%s9 + $0x28] sm:$0xff]
        %v984 = vld [vmem:[%s9 + $0x30] sm:$0xff]
        %v985 = vld [vmem:[%s9 + $0x38] sm:$0xff]
        %v986 = vld [vmem:[%s9 + $0x40] sm:$0xff]
        %v987 = vld [vmem:[%s9 + $0x48] sm:$0xff]
        %v988 = vld [vmem:[%s9 + $0x50] sm:$0xff]
        %v989 = vld [vmem:[%s9 + $0x58] sm:$0xff]
        %v990 = vld [vmem:[%s9 + $0x60] sm:$0xff]
        %v991 = vld [vmem:[%s9 + $0x68] sm:$0xff]
        %v992 = vld [vmem:[%s9 + $0x70] sm:$0xff]
        %v993 = vld [vmem:[%s9 + $0x78] sm:$0xff]
        %v994 = vld [vmem:[%s10] sm:$0x1]
        %v996 = vlaneseq
        %v997 = vshrl.u32 %v996, 7
        %v998 = vsub.s32 0, %v997
        %v999 = vrot.slane %v994, %v998
        %1001 = vmatprep.subr.mxu0 0.0
        %1002 = vmatpush1.msra.mxu0 %v993
        %1003 = vmatprep.subr.mxu0 0.0
        %1004 = vmatpush1.msra.mxu0 %v992
        %1005 = vmatprep.subr.mxu0 0.0
        %1006 = vmatpush1.msra.mxu0 %v991
        %1007 = vmatprep.subr.mxu0 0.0
        %1008 = vmatpush1.msra.mxu0 %v990
        %1009 = vmatprep.subr.mxu0 0.0
        %1010 = vmatpush1.msra.mxu0 %v989
        %1011 = vmatprep.subr.mxu0 0.0
        %1012 = vmatpush1.msra.mxu0 %v988
        %1013 = vmatprep.subr.mxu0 0.0
        %1014 = vmatpush1.msra.mxu0 %v987
        %1015 = vmatprep.subr.mxu0 0.0
        %1016 = vmatpush1.msra.mxu0 %v986
        %1017 = vmatprep.subr.mxu0 0.0
        %1018 = vmatpush1.msra.mxu0 %v985
        %1019 = vmatprep.subr.mxu0 0.0
        %1020 = vmatpush1.msra.mxu0 %v984
        %1021 = vmatprep.subr.mxu0 0.0
        %1022 = vmatpush1.msra.mxu0 %v983
        %1023 = vmatprep.subr.mxu0 0.0
        %1024 = vmatpush1.msra.mxu0 %v982
        %1025 = vmatprep.subr.mxu0 0.0
        %1026 = vmatpush1.msra.mxu0 %v981
        %1027 = vmatprep.subr.mxu0 0.0
        %1028 = vmatpush1.msra.mxu0 %v980
        %1029 = vmatprep.subr.mxu0 0.0
        %1030 = vmatpush1.msra.mxu0 %v979
        %1031 = vmatprep.subr.mxu0 0.0
        %1032 = vmatpush1.msra.mxu0 %v978
        %1033 = vmatprep.subr.mxu0 0.0
        %1034 = vmatpush2.msra.mxu0 0.0
        %1035 = vmatprep.subr.mxu0 0.0
        %1036 = vmatpush2.msra.mxu0 0.0
        %1037 = vmatprep.subr.mxu0 0.0
        %1038 = vmatpush2.msra.mxu0 0.0
        %1039 = vmatprep.subr.mxu0 0.0
        %1040 = vmatpush2.msra.mxu0 0.0
        %1041 = vmatprep.subr.mxu0 0.0
        %1042 = vmatpush2.msra.mxu0 0.0
        %1043 = vmatprep.subr.mxu0 0.0
        %1044 = vmatpush2.msra.mxu0 0.0
        %1045 = vmatprep.subr.mxu0 0.0
        %1046 = vmatpush2.msra.mxu0 0.0
        %1047 = vmatprep.subr.mxu0 0.0
        %1048 = vmatpush2.msra.mxu0 0.0
        %1049 = vmatprep.subr.mxu0 0.0
        %1050 = vmatpush2.msra.mxu0 0.0
        %1051 = vmatprep.subr.mxu0 0.0
        %1052 = vmatpush2.msra.mxu0 0.0
        %1053 = vmatprep.subr.mxu0 0.0
        %1054 = vmatpush2.msra.mxu0 0.0
        %1055 = vmatprep.subr.mxu0 0.0
        %1056 = vmatpush2.msra.mxu0 0.0
        %1057 = vmatprep.subr.mxu0 0.0
        %1058 = vmatpush2.msra.mxu0 0.0
        %1059 = vmatprep.subr.mxu0 0.0
        %1060 = vmatpush2.msra.mxu0 0.0
        %1061 = vmatprep.subr.mxu0 0.0
        %1062 = vmatpush2.msra.mxu0 0.0
        %1063 = vmatprep.subr.mxu0 0.0
        %1064 = vmatpush2.msra.mxu0 0.0
        %1065 = vmatprep.mubr.f32.mxu0 0.0
        %1066 = vmatmul.mubr.f32.gmra.mxu0 %v977
        %v1067 = vpop.f32.mrf.mxu0
        %v1068 = vadd.f32 %v999, %v1067
        %v1069 = vpop.f32.mrf.mxu0
        %1070 = vdwg.mxu0
        %v1071 = vmul.f32 %v1068, 0.5
        %v1072 = vmul.f32 %v1068, 0.70710677
        %v1073 = verf.f32.pop %v1072
        %v1074 = vadd.f32 %v1073, 1.0
        %v1075 = vmul.f32 %v1071, %v1074
        %v1076 = vld [vmem:[%s11] sm:$0xff]
        %v1077 = vld [vmem:[%s11 + $0x8] sm:$0xff]
        %v1078 = vld [vmem:[%s11 + $0x10] sm:$0xff]
        %v1079 = vld [vmem:[%s11 + $0x18] sm:$0xff]
        %v1080 = vld [vmem:[%s11 + $0x20] sm:$0xff]
        %v1081 = vld [vmem:[%s11 + $0x28] sm:$0xff]
        %v1082 = vld [vmem:[%s11 + $0x30] sm:$0xff]
        %v1083 = vld [vmem:[%s11 + $0x38] sm:$0xff]
        %v1084 = vld [vmem:[%s11 + $0x40] sm:$0xff]
        %v1085 = vld [vmem:[%s11 + $0x48] sm:$0xff]
        %v1086 = vld [vmem:[%s11 + $0x50] sm:$0xff]
        %v1087 = vld [vmem:[%s11 + $0x58] sm:$0xff]
        %v1088 = vld [vmem:[%s11 + $0x60] sm:$0xff]
        %v1089 = vld [vmem:[%s11 + $0x68] sm:$0xff]
        %v1090 = vld [vmem:[%s11 + $0x70] sm:$0xff]
        %v1091 = vld [vmem:[%s11 + $0x78] sm:$0xff]
        %v1092 = vld [vmem:[%s12] sm:$0x1]
        %v1094 = vlaneseq
        %v1095 = vshrl.u32 %v1094, 7
        %v1096 = vsub.s32 0, %v1095
        %v1097 = vrot.slane %v1092, %v1096
        %1099 = vmatprep.subr.mxu0 0.0
        %1100 = vmatpush1.msra.mxu0 %v1091
        %1101 = vmatprep.subr.mxu0 0.0
        %1102 = vmatpush1.msra.mxu0 %v1090
        %1103 = vmatprep.subr.mxu0 0.0
        %1104 = vmatpush1.msra.mxu0 %v1089
        %1105 = vmatprep.subr.mxu0 0.0
        %1106 = vmatpush1.msra.mxu0 %v1088
        %1107 = vmatprep.subr.mxu0 0.0
        %1108 = vmatpush1.msra.mxu0 %v1087
        %1109 = vmatprep.subr.mxu0 0.0
        %1110 = vmatpush1.msra.mxu0 %v1086
        %1111 = vmatprep.subr.mxu0 0.0
        %1112 = vmatpush1.msra.mxu0 %v1085
        %1113 = vmatprep.subr.mxu0 0.0
        %1114 = vmatpush1.msra.mxu0 %v1084
        %1115 = vmatprep.subr.mxu0 0.0
        %1116 = vmatpush1.msra.mxu0 %v1083
        %1117 = vmatprep.subr.mxu0 0.0
        %1118 = vmatpush1.msra.mxu0 %v1082
        %1119 = vmatprep.subr.mxu0 0.0
        %1120 = vmatpush1.msra.mxu0 %v1081
        %1121 = vmatprep.subr.mxu0 0.0
        %1122 = vmatpush1.msra.mxu0 %v1080
        %1123 = vmatprep.subr.mxu0 0.0
        %1124 = vmatpush1.msra.mxu0 %v1079
        %1125 = vmatprep.subr.mxu0 0.0
        %1126 = vmatpush1.msra.mxu0 %v1078
        %1127 = vmatprep.subr.mxu0 0.0
        %1128 = vmatpush1.msra.mxu0 %v1077
        %1129 = vmatprep.subr.mxu0 0.0
        %1130 = vmatpush1.msra.mxu0 %v1076
        %1131 = vmatprep.subr.mxu0 0.0
        %1132 = vmatpush2.msra.mxu0 0.0
        %1133 = vmatprep.subr.mxu0 0.0
        %1134 = vmatpush2.msra.mxu0 0.0
        %1135 = vmatprep.subr.mxu0 0.0
        %1136 = vmatpush2.msra.mxu0 0.0
        %1137 = vmatprep.subr.mxu0 0.0
        %1138 = vmatpush2.msra.mxu0 0.0
        %1139 = vmatprep.subr.mxu0 0.0
        %1140 = vmatpush2.msra.mxu0 0.0
        %1141 = vmatprep.subr.mxu0 0.0
        %1142 = vmatpush2.msra.mxu0 0.0
        %1143 = vmatprep.subr.mxu0 0.0
        %1144 = vmatpush2.msra.mxu0 0.0
        %1145 = vmatprep.subr.mxu0 0.0
        %1146 = vmatpush2.msra.mxu0 0.0
        %1147 = vmatprep.subr.mxu0 0.0
        %1148 = vmatpush2.msra.mxu0 0.0
        %1149 = vmatprep.subr.mxu0 0.0
        %1150 = vmatpush2.msra.mxu0 0.0
        %1151 = vmatprep.subr.mxu0 0.0
        %1152 = vmatpush2.msra.mxu0 0.0
        %1153 = vmatprep.subr.mxu0 0.0
        %1154 = vmatpush2.msra.mxu0 0.0
        %1155 = vmatprep.subr.mxu0 0.0
        %1156 = vmatpush2.msra.mxu0 0.0
        %1157 = vmatprep.subr.mxu0 0.0
        %1158 = vmatpush2.msra.mxu0 0.0
        %1159 = vmatprep.subr.mxu0 0.0
        %1160 = vmatpush2.msra.mxu0 0.0
        %1161 = vmatprep.subr.mxu0 0.0
        %1162 = vmatpush2.msra.mxu0 0.0
        %1163 = vmatprep.mubr.f32.mxu0 0.0
        %1164 = vmatmul.mubr.f32.gmra.mxu0 %v1075
        %v1165 = vpop.f32.mrf.mxu0
        %v1166 = vadd.f32 %v1097, %v1165
        %v1167 = vpop.f32.mrf.mxu0
        %1168 = vdwg.mxu0
        %v1169 = vadd.f32 %v948, %v1166
        %1170 = vst [vmem:[%s444] sm:$0xff] %v1169
        %s1171 = sand.u32 %s314, 1
        %s1172 = scalar_lea.sflag [#allocation5], %s1171
        %s1173 = sand.u32 %s314, 1
        %s1174 = smul.addr %s1173, 8
        %s1175 = scalar_lea.vmem [#allocation6], %s1174
        // Predicated region
        $region77: #{tpu_custom_call.1} parent=71 // pred_check
          %p1176 = pneg %p324
        $region78: #{tpu_custom_call.1} parent=71 // pred_check_branch
          %1178 = sbr.rel (%p1176) target = $region80
        $region79: #{tpu_custom_call.1} parent=71 // pred_region
          %s1180 = ssub.s32 128, 128
          %1181 = vsyncadd %s1172, %s1180
          %s1182 = smul.addr %s28, 128
          %s1183 = scalar_lea.hbm %s13, %s1182
          %s1185 = sshll.u32 %s1175, 4
          %s1186 = int_to_ptr.vmem [resolvable:$true] %s1185
          %1188 = dma.vmem_to_hbm [thread:$0]  %s1186, 128, %s1183, %s1172
        $region80: #{tpu_custom_call.1} parent=71 // pred_fallthru
          _
      $region72: #{tpu_custom_call.1} parent=5 // pred_fallthru
        _
      %p1189 = scmp.le.s32.totalorder 2, %s23
      // Predicated region
      $region81: #{tpu_custom_call.1} parent=5 // pred_check
        %p1190 = pneg %p1189
      $region82: #{tpu_custom_call.1} parent=5 // pred_check_branch
        %1192 = sbr.rel (%p1190) target = $region84
      $region83: #{tpu_custom_call.1} parent=5 // pred_region
        %s1193 = ssub.s32 %s23, 2
        // Predicated region
        $region85: #{tpu_custom_call.1} parent=83 // pred_check
          %p1194 = pneg %p330
        $region86: #{tpu_custom_call.1} parent=83 // pred_check_branch
          %1196 = sbr.rel (%p1194) target = $region88
        $region87: #{tpu_custom_call.1} parent=83 // pred_region
          %s1197 = sand.u32 %s315, 1
          %s1198 = scalar_lea.sflag [#allocation5], %s1197
          %s1199 = sand.u32 %s315, 1
          %s1200 = smul.addr %s1199, 8
          %s1201 = scalar_lea.vmem [#allocation6], %s1200
          %1202 = dma.done %s1198, 128
        $region88: #{tpu_custom_call.1} parent=83 // pred_fallthru
          _
      $region84: #{tpu_custom_call.1} parent=5 // pred_fallthru
        _
    $region6: #{tpu_custom_call.1} parent=1 // loop_footer
      %s27 = sadd.s32 1, %s23
    $region7: #{tpu_custom_call.1} parent=1 // loop_footer_branch
      %22 = sbr.rel target = $region3
    $region8: #{tpu_custom_call.1} parent=1 // loop_exit
      _
    %1203 = vsyncpa [#allocation4], 1
    %s1204 = scalar_lea.sflag [#allocation4], 1
    %1205 = vsyncpa %s1204, 1
    %1206 = vsyncpa [#allocation5], 1
    %s1207 = scalar_lea.sflag [#allocation5], 1
    %1208 = vsyncpa %s1207, 1

// kernel: tpu_custom_call.1
$region0: #{tpu_custom_call.1}
  #allocation0 [shape = 'u32[]', space=smem, size = 0x4, offset = 0x4, fixed_abs, tag = 'smem constant byte address 0x4 - core index']
  #allocation1 [shape = 'u32[144,128]{1,0:T(1,128)}', space=vmem, size = 0x12000, scoped, tag = 'internal scratch']
  #allocation2 [shape = 'f32[1,8,128]{2,1,0:T(8,128)}', space=vmem, size = 0x1000, scoped, tag = 'scratch operand']
  %s0 = inlined_call_operand.vmem [shape: f32[2,8,128], index: 0, kind: input, shape index: {}]
  %s1 = inlined_call_operand.vmem [shape: f32[1,128], index: 1, kind: input, shape index: {}]
  %s2 = inlined_call_operand.hbm [shape: f32[1,128], index: 2, kind: input, shape index: {}]
  %s3 = inlined_call_operand.vmem [shape: f32[128,8], index: 3, kind: input, shape index: {}]
  %s4 = inlined_call_operand.vmem [shape: f32[128,1], index: 4, kind: input, shape index: {}]
  %s5 = inlined_call_operand.vmem [shape: f32[8,128], index: 5, kind: input, shape index: {}]
  %s6 = inlined_call_operand.vmem [shape: f32[8,1], index: 6, kind: input, shape index: {}]
  %s7 = inlined_call_operand.vmem [shape: f32[1,128], index: 7, kind: input, shape index: {}]
  %s8 = inlined_call_operand.vmem [shape: f32[1,128], index: 8, kind: input, shape index: {}]
  %s9 = inlined_call_operand.vmem [shape: f32[128,128], index: 9, kind: input, shape index: {}]
  %s10 = inlined_call_operand.vmem [shape: f32[1,128], index: 10, kind: input, shape index: {}]
  %s11 = inlined_call_operand.vmem [shape: f32[128,128], index: 11, kind: input, shape index: {}]
  %s12 = inlined_call_operand.vmem [shape: f32[1,128], index: 12, kind: input, shape index: {}]
  %s13 = inlined_call_operand.hbm [shape: f32[2,8,128], index: 13, kind: output, shape index: {}]
  %s14 = sld [smem:[#allocation0]]
  $region89: #{tpu_custom_call.1} parent=0
    _
  %s16 = ssub.s32 1, %s14
  %s17 = scalar_select 0, %s16, %s14
  $region1: #{tpu_custom_call.1} parent=0
    #allocation3 [shape = 'u8[512]{0}', space=vmem, size = 0x400, scoped, tag = 'input window, operand 2, single buffered']
    #allocation4 [shape = 's32[2]{0}', space=sflag, size = 0x8, scoped, tag = 'scoped memory for tpu_custom_call.1']
    #allocation5 [shape = 's32[2]{0}', space=sflag, size = 0x8, scoped, tag = 'scoped memory for tpu_custom_call.1']
    #allocation6 [shape = 'u8[8192]{0}', space=vmem, size = 0x2000, scoped, tag = 'output window, operand 0']
    %18 = vsyncpa [#allocation4], 0
    %19 = vsyncpa [#allocation5], 0
    %s20 = scalar_lea.sflag [#allocation5], 1
    %21 = vsyncpa %s20, 0
    loop: start=0, step=1, limit=4
    $region2: #{tpu_custom_call.1} parent=1 // loop_pre_header
      _
    $region3: #{tpu_custom_call.1} parent=1 // loop_header
      %s23 = sphi 0, %s27
      %p24 = scmp.ge.s32.totalorder %s23, 4
      %s33 = sphi 0, %s35
      %s36 = sphi 0, %s33
      %s37 = sphi 0, %s36
      %s53 = sphi 0, %s37
      %s57 = sphi 0, %s57
      %s59 = sphi 0, %s57
      %s60 = sphi 0, %s59
      %s74 = sphi 0, %s60
      %s78 = sphi 0, %s78
      %s80 = sphi 0, %s78
      %s81 = sphi 0, %s80
      %s95 = sphi 0, %s81
      %s99 = sphi 0, %s99
      %s101 = sphi 0, %s99
      %s102 = sphi 0, %s101
      %s116 = sphi 0, %s102
      %s120 = sphi 0, %s120
      %s122 = sphi 0, %s120
      %s123 = sphi 0, %s122
      %s137 = sphi 0, %s123
      %s141 = sphi 0, %s141
      %s143 = sphi 0, %s141
      %s144 = sphi 0, %s143
      %s158 = sphi 0, %s144
      %s162 = sphi 0, %s162
      %s164 = sphi 0, %s162
      %s165 = sphi 0, %s164
      %s179 = sphi 0, %s165
      %s183 = sphi 0, %s183
      %s185 = sphi 0, %s183
      %s186 = sphi 0, %s185
      %s200 = sphi 0, %s186
      %s204 = sphi 0, %s204
      %s206 = sphi 0, %s204
      %s207 = sphi 0, %s206
      %s221 = sphi 0, %s207
      %s225 = sphi 0, %s225
      %s227 = sphi 0, %s225
      %s228 = sphi 0, %s227
      %s242 = sphi 0, %s228
      %s246 = sphi 0, %s246
      %s248 = sphi 0, %s246
      %s249 = sphi 0, %s248
      %s263 = sphi 0, %s249
      %s267 = sphi 0, %s267
      %s269 = sphi 0, %s267
      %s270 = sphi 0, %s269
      %s284 = sphi 0, %s270
      %s288 = sphi 0, %s288
      %s290 = sphi 0, %s288
      %s291 = sphi 0, %s290
      %s305 = sphi 0, %s291
      %s311 = sphi 0, %s313
      %s314 = sphi 0, %s311
      %s315 = sphi 0, %s314
      %s331 = sphi 0, %s315
    $region4: #{tpu_custom_call.1} parent=1 // loop_header_branch
      %26 = sbr.rel (%p24) target = $region8
    $region5: #{tpu_custom_call.1} parent=1 // loop_body
      %s28 = ssub.s32 %s23, 1
      %s29 = ssub.s32 %s23, 2
      %s30 = sadd.s32 %s23, 1
      %s31 = ssub.s32 %s23, %s30
      %p32 = scmp.eq.s32.totalorder %s31, 0
      %s34 = sadd.s32 %s33, 1
      %s35 = scalar_select %p32, %s33, %s34
      %p38 = pneg %p32
      %p39 = scmp.eq.s32.totalorder %s23, 1
      %p40 = por %p38, %p39
      %p41 = scmp.ne.s32.totalorder %s33, %s36
      %p42 = scmp.eq.s32.totalorder %s23, 0
      %p43 = por %p41, %p42
      %p44 = scmp.ne.s32.totalorder %s33, %s36
      %p45 = scmp.eq.s32.totalorder %s28, 1
      %p46 = por %p44, %p45
      %p47 = scmp.ne.s32.totalorder %s36, %s37
      %p48 = scmp.eq.s32.totalorder %s28, 0
      %p49 = por %p47, %p48
      %p50 = scmp.ne.s32.totalorder %s36, %s37
      %p51 = scmp.eq.s32.totalorder %s29, 1
      %p52 = por %p50, %p51
      %p54 = scmp.ne.s32.totalorder %s37, %s53
      %p55 = scmp.eq.s32.totalorder %s29, 0
      %p56 = por %p54, %p55
      %s58 = sadd.s32 %s57, 1
      %p61 = scmp.eq.s32.totalorder %s23, 1
      %p62 = scmp.ne.s32.totalorder %s57, %s59
      %p63 = scmp.eq.s32.totalorder %s23, 0
      %p64 = por %p62, %p63
      %p65 = scmp.ne.s32.totalorder %s57, %s59
      %p66 = scmp.eq.s32.totalorder %s28, 1
      %p67 = por %p65, %p66
      %p68 = scmp.ne.s32.totalorder %s59, %s60
      %p69 = scmp.eq.s32.totalorder %s28, 0
      %p70 = por %p68, %p69
      %p71 = scmp.ne.s32.totalorder %s59, %s60
      %p72 = scmp.eq.s32.totalorder %s29, 1
      %p73 = por %p71, %p72
      %p75 = scmp.ne.s32.totalorder %s60, %s74
      %p76 = scmp.eq.s32.totalorder %s29, 0
      %p77 = por %p75, %p76
      %s79 = sadd.s32 %s78, 1
      %p82 = scmp.eq.s32.totalorder %s23, 1
      %p83 = scmp.ne.s32.totalorder %s78, %s80
      %p84 = scmp.eq.s32.totalorder %s23, 0
      %p85 = por %p83, %p84
      %p86 = scmp.ne.s32.totalorder %s78, %s80
      %p87 = scmp.eq.s32.totalorder %s28, 1
      %p88 = por %p86, %p87
      %p89 = scmp.ne.s32.totalorder %s80, %s81
      %p90 = scmp.eq.s32.totalorder %s28, 0
      %p91 = por %p89, %p90
      %p92 = scmp.ne.s32.totalorder %s80, %s81
      %p93 = scmp.eq.s32.totalorder %s29, 1
      %p94 = por %p92, %p93
      %p96 = scmp.ne.s32.totalorder %s81, %s95
      %p97 = scmp.eq.s32.totalorder %s29, 0
      %p98 = por %p96, %p97
      %s100 = sadd.s32 %s99, 1
      %p103 = scmp.eq.s32.totalorder %s23, 1
      %p104 = scmp.ne.s32.totalorder %s99, %s101
      %p105 = scmp.eq.s32.totalorder %s23, 0
      %p106 = por %p104, %p105
      %p107 = scmp.ne.s32.totalorder %s99, %s101
      %p108 = scmp.eq.s32.totalorder %s28, 1
      %p109 = por %p107, %p108
      %p110 = scmp.ne.s32.totalorder %s101, %s102
      %p111 = scmp.eq.s32.totalorder %s28, 0
      %p112 = por %p110, %p111
      %p113 = scmp.ne.s32.totalorder %s101, %s102
      %p114 = scmp.eq.s32.totalorder %s29, 1
      %p115 = por %p113, %p114
      %p117 = scmp.ne.s32.totalorder %s102, %s116
      %p118 = scmp.eq.s32.totalorder %s29, 0
      %p119 = por %p117, %p118
      %s121 = sadd.s32 %s120, 1
      %p124 = scmp.eq.s32.totalorder %s23, 1
      %p125 = scmp.ne.s32.totalorder %s120, %s122
      %p126 = scmp.eq.s32.totalorder %s23, 0
      %p127 = por %p125, %p126
      %p128 = scmp.ne.s32.totalorder %s120, %s122
      %p129 = scmp.eq.s32.totalorder %s28, 1
      %p130 = por %p128, %p129
      %p131 = scmp.ne.s32.totalorder %s122, %s123
      %p132 = scmp.eq.s32.totalorder %s28, 0
      %p133 = por %p131, %p132
      %p134 = scmp.ne.s32.totalorder %s122, %s123
      %p135 = scmp.eq.s32.totalorder %s29, 1
      %p136 = por %p134, %p135
      %p138 = scmp.ne.s32.totalorder %s123, %s137
      %p139 = scmp.eq.s32.totalorder %s29, 0
      %p140 = por %p138, %p139
      %s142 = sadd.s32 %s141, 1
      %p145 = scmp.eq.s32.totalorder %s23, 1
      %p146 = scmp.ne.s32.totalorder %s141, %s143
      %p147 = scmp.eq.s32.totalorder %s23, 0
      %p148 = por %p146, %p147
      %p149 = scmp.ne.s32.totalorder %s141, %s143
      %p150 = scmp.eq.s32.totalorder %s28, 1
      %p151 = por %p149, %p150
      %p152 = scmp.ne.s32.totalorder %s143, %s144
      %p153 = scmp.eq.s32.totalorder %s28, 0
      %p154 = por %p152, %p153
      %p155 = scmp.ne.s32.totalorder %s143, %s144
      %p156 = scmp.eq.s32.totalorder %s29, 1
      %p157 = por %p155, %p156
      %p159 = scmp.ne.s32.totalorder %s144, %s158
      %p160 = scmp.eq.s32.totalorder %s29, 0
      %p161 = por %p159, %p160
      %s163 = sadd.s32 %s162, 1
      %p166 = scmp.eq.s32.totalorder %s23, 1
      %p167 = scmp.ne.s32.totalorder %s162, %s164
      %p168 = scmp.eq.s32.totalorder %s23, 0
      %p169 = por %p167, %p168
      %p170 = scmp.ne.s32.totalorder %s162, %s164
      %p171 = scmp.eq.s32.totalorder %s28, 1
      %p172 = por %p170, %p171
      %p173 = scmp.ne.s32.totalorder %s164, %s165
      %p174 = scmp.eq.s32.totalorder %s28, 0
      %p175 = por %p173, %p174
      %p176 = scmp.ne.s32.totalorder %s164, %s165
      %p177 = scmp.eq.s32.totalorder %s29, 1
      %p178 = por %p176, %p177
      %p180 = scmp.ne.s32.totalorder %s165, %s179
      %p181 = scmp.eq.s32.totalorder %s29, 0
      %p182 = por %p180, %p181
      %s184 = sadd.s32 %s183, 1
      %p187 = scmp.eq.s32.totalorder %s23, 1
      %p188 = scmp.ne.s32.totalorder %s183, %s185
      %p189 = scmp.eq.s32.totalorder %s23, 0
      %p190 = por %p188, %p189
      %p191 = scmp.ne.s32.totalorder %s183, %s185
      %p192 = scmp.eq.s32.totalorder %s28, 1
      %p193 = por %p191, %p192
      %p194 = scmp.ne.s32.totalorder %s185, %s186
      %p195 = scmp.eq.s32.totalorder %s28, 0
      %p196 = por %p194, %p195
      %p197 = scmp.ne.s32.totalorder %s185, %s186
      %p198 = scmp.eq.s32.totalorder %s29, 1
      %p199 = por %p197, %p198
      %p201 = scmp.ne.s32.totalorder %s186, %s200
      %p202 = scmp.eq.s32.totalorder %s29, 0
      %p203 = por %p201, %p202
      %s205 = sadd.s32 %s204, 1
      %p208 = scmp.eq.s32.totalorder %s23, 1
      %p209 = scmp.ne.s32.totalorder %s204, %s206
      %p210 = scmp.eq.s32.totalorder %s23, 0
      %p211 = por %p209, %p210
      %p212 = scmp.ne.s32.totalorder %s204, %s206
      %p213 = scmp.eq.s32.totalorder %s28, 1
      %p214 = por %p212, %p213
      %p215 = scmp.ne.s32.totalorder %s206, %s207
      %p216 = scmp.eq.s32.totalorder %s28, 0
      %p217 = por %p215, %p216
      %p218 = scmp.ne.s32.totalorder %s206, %s207
      %p219 = scmp.eq.s32.totalorder %s29, 1
      %p220 = por %p218, %p219
      %p222 = scmp.ne.s32.totalorder %s207, %s221
      %p223 = scmp.eq.s32.totalorder %s29, 0
      %p224 = por %p222, %p223
      %s226 = sadd.s32 %s225, 1
      %p229 = scmp.eq.s32.totalorder %s23, 1
      %p230 = scmp.ne.s32.totalorder %s225, %s227
      %p231 = scmp.eq.s32.totalorder %s23, 0
      %p232 = por %p230, %p231
      %p233 = scmp.ne.s32.totalorder %s225, %s227
      %p234 = scmp.eq.s32.totalorder %s28, 1
      %p235 = por %p233, %p234
      %p236 = scmp.ne.s32.totalorder %s227, %s228
      %p237 = scmp.eq.s32.totalorder %s28, 0
      %p238 = por %p236, %p237
      %p239 = scmp.ne.s32.totalorder %s227, %s228
      %p240 = scmp.eq.s32.totalorder %s29, 1
      %p241 = por %p239, %p240
      %p243 = scmp.ne.s32.totalorder %s228, %s242
      %p244 = scmp.eq.s32.totalorder %s29, 0
      %p245 = por %p243, %p244
      %s247 = sadd.s32 %s246, 1
      %p250 = scmp.eq.s32.totalorder %s23, 1
      %p251 = scmp.ne.s32.totalorder %s246, %s248
      %p252 = scmp.eq.s32.totalorder %s23, 0
      %p253 = por %p251, %p252
      %p254 = scmp.ne.s32.totalorder %s246, %s248
      %p255 = scmp.eq.s32.totalorder %s28, 1
      %p256 = por %p254, %p255
      %p257 = scmp.ne.s32.totalorder %s248, %s249
      %p258 = scmp.eq.s32.totalorder %s28, 0
      %p259 = por %p257, %p258
      %p260 = scmp.ne.s32.totalorder %s248, %s249
      %p261 = scmp.eq.s32.totalorder %s29, 1
      %p262 = por %p260, %p261
      %p264 = scmp.ne.s32.totalorder %s249, %s263
      %p265 = scmp.eq.s32.totalorder %s29, 0
      %p266 = por %p264, %p265
      %s268 = sadd.s32 %s267, 1
      %p271 = scmp.eq.s32.totalorder %s23, 1
      %p272 = scmp.ne.s32.totalorder %s267, %s269
      %p273 = scmp.eq.s32.totalorder %s23, 0
      %p274 = por %p272, %p273
      %p275 = scmp.ne.s32.totalorder %s267, %s269
      %p276 = scmp.eq.s32.totalorder %s28, 1
      %p277 = por %p275, %p276
      %p278 = scmp.ne.s32.totalorder %s269, %s270
      %p279 = scmp.eq.s32.totalorder %s28, 0
      %p280 = por %p278, %p279
      %p281 = scmp.ne.s32.totalorder %s269, %s270
      %p282 = scmp.eq.s32.totalorder %s29, 1
      %p283 = por %p281, %p282
      %p285 = scmp.ne.s32.totalorder %s270, %s284
      %p286 = scmp.eq.s32.totalorder %s29, 0
      %p287 = por %p285, %p286
      %s289 = sadd.s32 %s288, 1
      %p292 = scmp.eq.s32.totalorder %s23, 1
      %p293 = scmp.ne.s32.totalorder %s288, %s290
      %p294 = scmp.eq.s32.totalorder %s23, 0
      %p295 = por %p293, %p294
      %p296 = scmp.ne.s32.totalorder %s288, %s290
      %p297 = scmp.eq.s32.totalorder %s28, 1
      %p298 = por %p296, %p297
      %p299 = scmp.ne.s32.totalorder %s290, %s291
      %p300 = scmp.eq.s32.totalorder %s28, 0
      %p301 = por %p299, %p300
      %p302 = scmp.ne.s32.totalorder %s290, %s291
      %p303 = scmp.eq.s32.totalorder %s29, 1
      %p304 = por %p302, %p303
      %p306 = scmp.ne.s32.totalorder %s291, %s305
      %p307 = scmp.eq.s32.totalorder %s29, 0
      %p308 = por %p306, %p307
      %s309 = ssub.s32 %s23, %s30
      %p310 = scmp.eq.s32.totalorder %s309, 0
      %s312 = sadd.s32 %s311, 1
      %s313 = scalar_select %p310, %s311, %s312
      %p316 = pneg %p310
      %p317 = scmp.eq.s32.totalorder %s23, 1
      %p318 = por %p316, %p317
      %p319 = scmp.ne.s32.totalorder %s311, %s314
      %p320 = scmp.eq.s32.totalorder %s23, 0
      %p321 = por %p319, %p320
      %p322 = scmp.ne.s32.totalorder %s311, %s314
      %p323 = scmp.eq.s32.totalorder %s28, 1
      %p324 = por %p322, %p323
      %p325 = scmp.ne.s32.totalorder %s314, %s315
      %p326 = scmp.eq.s32.totalorder %s28, 0
      %p327 = por %p325, %p326
      %p328 = scmp.ne.s32.totalorder %s314, %s315
      %p329 = scmp.eq.s32.totalorder %s29, 1
      %p330 = por %p328, %p329
      %p332 = scmp.ne.s32.totalorder %s315, %s331
      %p333 = scmp.eq.s32.totalorder %s29, 0
      %p334 = por %p332, %p333
      %p335 = scmp.le.s32.totalorder 1, %s23
      %p336 = scmp.lt.s32.totalorder %s23, 3
      %p337 = pnand %p335, %p336
      %p338 = pneg %p337
      // Predicated region
      $region9: #{tpu_custom_call.1} parent=5 // pred_check
        _
      $region10: #{tpu_custom_call.1} parent=5 // pred_check_branch
        %340 = sbr.rel (%p337) target = $region12
      $region11: #{tpu_custom_call.1} parent=5 // pred_region
        %s341 = ssub.s32 %s23, 1
        // Predicated region
        $region13: #{tpu_custom_call.1} parent=11 // pred_check
          %p342 = pneg %p70
        $region14: #{tpu_custom_call.1} parent=11 // pred_check_branch
          %344 = sbr.rel (%p342) target = $region16
        $region15: #{tpu_custom_call.1} parent=11 // pred_region
          _
        $region16: #{tpu_custom_call.1} parent=11 // pred_fallthru
          _
        // Predicated region
        $region17: #{tpu_custom_call.1} parent=11 // pred_check
          %p345 = pneg %p91
        $region18: #{tpu_custom_call.1} parent=11 // pred_check_branch
          %347 = sbr.rel (%p345) target = $region20
        $region19: #{tpu_custom_call.1} parent=11 // pred_region
          %s349 = ssub.s32 16, 16
          %350 = vsyncadd [#allocation4], %s349
          %s352 = sshll.u32 [#allocation3], 4
          %s353 = int_to_ptr.vmem [resolvable:$true] %s352
          %355 = dma.hbm_to_vmem [thread:$0]  %s2, 16, %s353, [#allocation4]
        $region20: #{tpu_custom_call.1} parent=11 // pred_fallthru
          _
        // Predicated region
        $region21: #{tpu_custom_call.1} parent=11 // pred_check
          %p356 = pneg %p112
        $region22: #{tpu_custom_call.1} parent=11 // pred_check_branch
          %358 = sbr.rel (%p356) target = $region24
        $region23: #{tpu_custom_call.1} parent=11 // pred_region
          _
        $region24: #{tpu_custom_call.1} parent=11 // pred_fallthru
          _
        // Predicated region
        $region25: #{tpu_custom_call.1} parent=11 // pred_check
          %p359 = pneg %p133
        $region26: #{tpu_custom_call.1} parent=11 // pred_check_branch
          %361 = sbr.rel (%p359) target = $region28
        $region27: #{tpu_custom_call.1} parent=11 // pred_region
          _
        $region28: #{tpu_custom_call.1} parent=11 // pred_fallthru
          _
        // Predicated region
        $region29: #{tpu_custom_call.1} parent=11 // pred_check
          %p362 = pneg %p154
        $region30: #{tpu_custom_call.1} parent=11 // pred_check_branch
          %364 = sbr.rel (%p362) target = $region32
        $region31: #{tpu_custom_call.1} parent=11 // pred_region
          _
        $region32: #{tpu_custom_call.1} parent=11 // pred_fallthru
          _
        // Predicated region
        $region33: #{tpu_custom_call.1} parent=11 // pred_check
          %p365 = pneg %p175
        $region34: #{tpu_custom_call.1} parent=11 // pred_check_branch
          %367 = sbr.rel (%p365) target = $region36
        $region35: #{tpu_custom_call.1} parent=11 // pred_region
          _
        $region36: #{tpu_custom_call.1} parent=11 // pred_fallthru
          _
        // Predicated region
        $region37: #{tpu_custom_call.1} parent=11 // pred_check
          %p368 = pneg %p196
        $region38: #{tpu_custom_call.1} parent=11 // pred_check_branch
          %370 = sbr.rel (%p368) target = $region40
        $region39: #{tpu_custom_call.1} parent=11 // pred_region
          _
        $region40: #{tpu_custom_call.1} parent=11 // pred_fallthru
          _
        // Predicated region
        $region41: #{tpu_custom_call.1} parent=11 // pred_check
          %p371 = pneg %p217
        $region42: #{tpu_custom_call.1} parent=11 // pred_check_branch
          %373 = sbr.rel (%p371) target = $region44
        $region43: #{tpu_custom_call.1} parent=11 // pred_region
          _
        $region44: #{tpu_custom_call.1} parent=11 // pred_fallthru
          _
        // Predicated region
        $region45: #{tpu_custom_call.1} parent=11 // pred_check
          %p374 = pneg %p238
        $region46: #{tpu_custom_call.1} parent=11 // pred_check_branch
          %376 = sbr.rel (%p374) target = $region48
        $region47: #{tpu_custom_call.1} parent=11 // pred_region
          _
        $region48: #{tpu_custom_call.1} parent=11 // pred_fallthru
          _
        // Predicated region
        $region49: #{tpu_custom_call.1} parent=11 // pred_check
          %p377 = pneg %p259
        $region50: #{tpu_custom_call.1} parent=11 // pred_check_branch
          %379 = sbr.rel (%p377) target = $region52
        $region51: #{tpu_custom_call.1} parent=11 // pred_region
          _
        $region52: #{tpu_custom_call.1} parent=11 // pred_fallthru
          _
        // Predicated region
        $region53: #{tpu_custom_call.1} parent=11 // pred_check
          %p380 = pneg %p280
        $region54: #{tpu_custom_call.1} parent=11 // pred_check_branch
          %382 = sbr.rel (%p380) target = $region56
        $region55: #{tpu_custom_call.1} parent=11 // pred_region
          _
        $region56: #{tpu_custom_call.1} parent=11 // pred_fallthru
          _
        // Predicated region
        $region57: #{tpu_custom_call.1} parent=11 // pred_check
          %p383 = pneg %p301
        $region58: #{tpu_custom_call.1} parent=11 // pred_check_branch
          %385 = sbr.rel (%p383) target = $region60
        $region59: #{tpu_custom_call.1} parent=11 // pred_region
          _
        $region60: #{tpu_custom_call.1} parent=11 // pred_fallthru
          _
      $region12: #{tpu_custom_call.1} parent=5 // pred_fallthru
        _
      %p386 = scmp.lt.s32.totalorder %s23, 2
      // Predicated region
      $region61: #{tpu_custom_call.1} parent=5 // pred_check
        %p387 = pneg %p386
      $region62: #{tpu_custom_call.1} parent=5 // pred_check_branch
        %389 = sbr.rel (%p387) target = $region64
      $region63: #{tpu_custom_call.1} parent=5 // pred_region
        // Predicated region
        $region65: #{tpu_custom_call.1} parent=63 // pred_check
          %p390 = pneg %p43
        $region66: #{tpu_custom_call.1} parent=63 // pred_check_branch
          %392 = sbr.rel (%p390) target = $region68
        $region67: #{tpu_custom_call.1} parent=63 // pred_region
          %p393 = scmp.lt.s32.totalorder %s23, 1
          %s394 = scalar_select %p393, %s23, 1
          %s395 = smul.addr %s394, 8
          %s396 = scalar_lea.vmem %s0, %s395
        $region68: #{tpu_custom_call.1} parent=63 // pred_fallthru
          _
      $region64: #{tpu_custom_call.1} parent=5 // pred_fallthru
        _
      %p397 = scmp.le.s32.totalorder 1, %s23
      %p398 = scmp.lt.s32.totalorder %s23, 3
      %p399 = pnand %p397, %p398
      %p400 = pneg %p399
      // Predicated region
      $region69: #{tpu_custom_call.1} parent=5 // pred_check
        _
      $region70: #{tpu_custom_call.1} parent=5 // pred_check_branch
        %402 = sbr.rel (%p399) target = $region72
      $region71: #{tpu_custom_call.1} parent=5 // pred_region
        %s403 = ssub.s32 %s23, 1
        // Predicated region
        $region73: #{tpu_custom_call.1} parent=71 // pred_check
          %p404 = pneg %p91
        $region74: #{tpu_custom_call.1} parent=71 // pred_check_branch
          %406 = sbr.rel (%p404) target = $region76
        $region75: #{tpu_custom_call.1} parent=71 // pred_region
          %407 = dma.done [#allocation4], 16
        $region76: #{tpu_custom_call.1} parent=71 // pred_fallthru
          _
        %p408 = scmp.lt.s32.totalorder %s28, 1
        %s409 = scalar_select %p408, %s28, 1
        %s410 = smul.addr %s409, 8
        %s411 = scalar_lea.vmem %s0, %s410
        %p412 = pneg %p49
        %p413 = pneg %p46
        %p414 = pneg %p70
        %p415 = pneg %p67
        %p416 = pneg %p91
        %p417 = pneg %p88
        %p418 = pneg %p112
        %p419 = pneg %p109
        %p420 = pneg %p133
        %p421 = pneg %p130
        %p422 = pneg %p154
        %p423 = pneg %p151
        %p424 = pneg %p175
        %p425 = pneg %p172
        %p426 = pneg %p196
        %p427 = pneg %p193
        %p428 = pneg %p217
        %p429 = pneg %p214
        %p430 = pneg %p238
        %p431 = pneg %p235
        %p432 = pneg %p259
        %p433 = pneg %p256
        %p434 = pneg %p280
        %p435 = pneg %p277
        %p436 = pneg %p301
        %p437 = pneg %p298
        %p438 = pneg %p327
        %p439 = pneg %p324
        %s440 = sand.u32 %s314, 1
        %s441 = scalar_lea.sflag [#allocation5], %s440
        %s442 = sand.u32 %s314, 1
        %s443 = smul.addr %s442, 8
        %s444 = scalar_lea.vmem [#allocation6], %s443
        %p445 = scmp.lt.s32.totalorder %s28, 1
        %s446 = scalar_select %p445, %s28, 1
        %s447 = smul.addr %s446, 8
        %s448 = scalar_lea.vmem %s0, %s447
        %v449 = vld [vmem:[%s448] sm:$0xff]
        %v450 = vlaneseq
        %v451 = vand.u32 %v450, 127
        %vm452 = vcmp.lt.s32.totalorder %v451, 32
        %v453 = vld [vmem:[%s1] sm:$0x1]
        %v454 = vld [vmem:[#allocation3] sm:$0x1]
        %455 = vadd.xlane.f32.xlu0 %v449
        %v456 = vpop.xlane.xlu0 %455
        %v457 = vmul.f32 %v456, 0.03125
        %v458 = vsub.f32 %v449, %v457
        %v459 = vsel %vm452, 1, 0
        %vm460 = vcmp.eq.s32.totalorder %v459, 1
        %v461 = vsel %vm460, %v458, 0.0
        %v462 = vmul.f32 %v461, %v461
        %463 = vadd.xlane.f32.xlu0 %v462
        %v464 = vpop.xlane.xlu0 %463
        %v465 = vmul.f32 %v464, 0.03125
        %v466 = vadd.f32 %v465, 1e-05
        %v467 = vrsqrt.pop %v466
        %v468 = vmul.f32 %v461, %v467
        %v470 = vlaneseq
        %v471 = vshrl.u32 %v470, 7
        %v472 = vsub.s32 0, %v471
        %v473 = vrot.slane %v453, %v472
        %v475 = vmul.f32 %v468, %v473
        %v477 = vlaneseq
        %v478 = vshrl.u32 %v477, 7
        %v479 = vsub.s32 0, %v478
        %v480 = vrot.slane %v454, %v479
        %v482 = vadd.f32 %v475, %v480
        %v483 = vld [vmem:[%s3] sm:$0xff]
        %v484 = vld [vmem:[%s3 + $0x8] sm:$0xff]
        %v485 = vld [vmem:[%s3 + $0x10] sm:$0xff]
        %v486 = vld [vmem:[%s3 + $0x18] sm:$0xff]
        %v487 = vld [vmem:[%s3 + $0x20] sm:$0xff]
        %v488 = vld [vmem:[%s3 + $0x28] sm:$0xff]
        %v489 = vld [vmem:[%s3 + $0x30] sm:$0xff]
        %v490 = vld [vmem:[%s3 + $0x38] sm:$0xff]
        %v491 = vld [vmem:[%s3 + $0x40] sm:$0xff]
        %v492 = vld [vmem:[%s3 + $0x48] sm:$0xff]
        %v493 = vld [vmem:[%s3 + $0x50] sm:$0xff]
        %v494 = vld [vmem:[%s3 + $0x58] sm:$0xff]
        %v495 = vld [vmem:[%s3 + $0x60] sm:$0xff]
        %v496 = vld [vmem:[%s3 + $0x68] sm:$0xff]
        %v497 = vld [vmem:[%s3 + $0x70] sm:$0xff]
        %v498 = vld [vmem:[%s3 + $0x78] sm:$0xff]
        %v499 = vld [vmem:[%s4] sm:$0xff]
        %v500 = vld [vmem:[%s4 + $0x8] sm:$0xff]
        %v501 = vld [vmem:[%s4 + $0x10] sm:$0xff]
        %v502 = vld [vmem:[%s4 + $0x18] sm:$0xff]
        %v503 = vld [vmem:[%s4 + $0x20] sm:$0xff]
        %v504 = vld [vmem:[%s4 + $0x28] sm:$0xff]
        %v505 = vld [vmem:[%s4 + $0x30] sm:$0xff]
        %v506 = vld [vmem:[%s4 + $0x38] sm:$0xff]
        %v507 = vld [vmem:[%s4 + $0x40] sm:$0xff]
        %v508 = vld [vmem:[%s4 + $0x48] sm:$0xff]
        %v509 = vld [vmem:[%s4 + $0x50] sm:$0xff]
        %v510 = vld [vmem:[%s4 + $0x58] sm:$0xff]
        %v511 = vld [vmem:[%s4 + $0x60] sm:$0xff]
        %v512 = vld [vmem:[%s4 + $0x68] sm:$0xff]
        %v513 = vld [vmem:[%s4 + $0x70] sm:$0xff]
        %v514 = vld [vmem:[%s4 + $0x78] sm:$0xff]
        %v515 = vld [vmem:[%s5] sm:$0xff]
        %v516 = vld [vmem:[%s6] sm:$0xff]
        %518 = vset.pattern.permute.xlu0 0
        %519 = vperm.xlu0 %518, %v499
        %v520 = vpop.permute.xlu0 %519
        %523 = vset.pattern.permute.xlu0 0
        %524 = vperm.xlu0 %523, %v500
        %v525 = vpop.permute.xlu0 %524
        %528 = vset.pattern.permute.xlu0 0
        %529 = vperm.xlu0 %528, %v501
        %v530 = vpop.permute.xlu0 %529
        %533 = vset.pattern.permute.xlu0 0
        %534 = vperm.xlu0 %533, %v502
        %v535 = vpop.permute.xlu0 %534
        %538 = vset.pattern.permute.xlu0 0
        %539 = vperm.xlu0 %538, %v503
        %v540 = vpop.permute.xlu0 %539
        %543 = vset.pattern.permute.xlu0 0
        %544 = vperm.xlu0 %543, %v504
        %v545 = vpop.permute.xlu0 %544
        %548 = vset.pattern.permute.xlu0 0
        %549 = vperm.xlu0 %548, %v505
        %v550 = vpop.permute.xlu0 %549
        %553 = vset.pattern.permute.xlu0 0
        %554 = vperm.xlu0 %553, %v506
        %v555 = vpop.permute.xlu0 %554
        %558 = vset.pattern.permute.xlu0 0
        %559 = vperm.xlu0 %558, %v507
        %v560 = vpop.permute.xlu0 %559
        %563 = vset.pattern.permute.xlu0 0
        %564 = vperm.xlu0 %563, %v508
        %v565 = vpop.permute.xlu0 %564
        %568 = vset.pattern.permute.xlu0 0
        %569 = vperm.xlu0 %568, %v509
        %v570 = vpop.permute.xlu0 %569
        %573 = vset.pattern.permute.xlu0 0
        %574 = vperm.xlu0 %573, %v510
        %v575 = vpop.permute.xlu0 %574
        %578 = vset.pattern.permute.xlu0 0
        %579 = vperm.xlu0 %578, %v511
        %v580 = vpop.permute.xlu0 %579
        %583 = vset.pattern.permute.xlu0 0
        %584 = vperm.xlu0 %583, %v512
        %v585 = vpop.permute.xlu0 %584
        %588 = vset.pattern.permute.xlu0 0
        %589 = vperm.xlu0 %588, %v513
        %v590 = vpop.permute.xlu0 %589
        %593 = vset.pattern.permute.xlu0 0
        %594 = vperm.xlu0 %593, %v514
        %v595 = vpop.permute.xlu0 %594
        %vm597 = vcmask 64512
        %v599 = vsel %vm597, %v483, 0
        %v602 = vsel %vm597, %v484, 0
        %v605 = vsel %vm597, %v485, 0
        %v608 = vsel %vm597, %v486, 0
        %v611 = vsel %vm597, %v487, 0
        %v614 = vsel %vm597, %v488, 0
        %v617 = vsel %vm597, %v489, 0
        %v620 = vsel %vm597, %v490, 0
        %v623 = vsel %vm597, %v491, 0
        %v626 = vsel %vm597, %v492, 0
        %v629 = vsel %vm597, %v493, 0
        %v632 = vsel %vm597, %v494, 0
        %v635 = vsel %vm597, %v495, 0
        %v638 = vsel %vm597, %v496, 0
        %v641 = vsel %vm597, %v497, 0
        %v644 = vsel %vm597, %v498, 0
        %646 = vmatprep.subr.mxu0 0.0
        %647 = vmatpush1.msra.mxu0 0.0
        %648 = vmatprep.subr.mxu0 0.0
        %649 = vmatpush1.msra.mxu0 0.0
        %650 = vmatprep.subr.mxu0 0.0
        %651 = vmatpush1.msra.mxu0 0.0
        %652 = vmatprep.subr.mxu0 0.0
        %653 = vmatpush1.msra.mxu0 0.0
        %654 = vmatprep.subr.mxu0 0.0
        %655 = vmatpush1.msra.mxu0 0.0
        %656 = vmatprep.subr.mxu0 0.0
        %657 = vmatpush1.msra.mxu0 0.0
        %658 = vmatprep.subr.mxu0 0.0
        %659 = vmatpush1.msra.mxu0 0.0
        %660 = vmatprep.subr.mxu0 0.0
        %661 = vmatpush1.msra.mxu0 0.0
        %662 = vmatprep.subr.mxu0 0.0
        %663 = vmatpush1.msra.mxu0 0.0
        %664 = vmatprep.subr.mxu0 0.0
        %665 = vmatpush1.msra.mxu0 0.0
        %666 = vmatprep.subr.mxu0 0.0
        %667 = vmatpush1.msra.mxu0 0.0
        %668 = vmatprep.subr.mxu0 0.0
        %669 = vmatpush1.msra.mxu0 0.0
        %670 = vmatprep.subr.mxu0 0.0
        %671 = vmatpush1.msra.mxu0 0.0
        %672 = vmatprep.subr.mxu0 0.0
        %673 = vmatpush1.msra.mxu0 0.0
        %674 = vmatprep.subr.mxu0 0.0
        %675 = vmatpush1.msra.mxu0 0.0
        %676 = vmatprep.subr.mxu0 0.0
        %677 = vmatpush1.msra.mxu0 %v482
        %678 = vmatprep.subr.mxu0 0.0
        %679 = vmatpush2.msra.mxu0 0.0
        %680 = vmatprep.subr.mxu0 0.0
        %681 = vmatpush2.msra.mxu0 0.0
        %682 = vmatprep.subr.mxu0 0.0
        %683 = vmatpush2.msra.mxu0 0.0
        %684 = vmatprep.subr.mxu0 0.0
        %685 = vmatpush2.msra.mxu0 0.0
        %686 = vmatprep.subr.mxu0 0.0
        %687 = vmatpush2.msra.mxu0 0.0
        %688 = vmatprep.subr.mxu0 0.0
        %689 = vmatpush2.msra.mxu0 0.0
        %690 = vmatprep.subr.mxu0 0.0
        %691 = vmatpush2.msra.mxu0 0.0
        %692 = vmatprep.subr.mxu0 0.0
        %693 = vmatpush2.msra.mxu0 0.0
        %694 = vmatprep.subr.mxu0 0.0
        %695 = vmatpush2.msra.mxu0 0.0
        %696 = vmatprep.subr.mxu0 0.0
        %697 = vmatpush2.msra.mxu0 0.0
        %698 = vmatprep.subr.mxu0 0.0
        %699 = vmatpush2.msra.mxu0 0.0
        %700 = vmatprep.subr.mxu0 0.0
        %701 = vmatpush2.msra.mxu0 0.0
        %702 = vmatprep.subr.mxu0 0.0
        %703 = vmatpush2.msra.mxu0 0.0
        %704 = vmatprep.subr.mxu0 0.0
        %705 = vmatpush2.msra.mxu0 0.0
        %706 = vmatprep.subr.mxu0 0.0
        %707 = vmatpush2.msra.mxu0 0.0
        %708 = vmatprep.subr.mxu0 0.0
        %709 = vmatpush2.msra.mxu0 0.0
        %710 = vmatprep.mubr.f32.mxu0 0.0
        %711 = vmatmul.mubr.f32.gmra.mxu0 %v599
        %v712 = vpop.f32.mrf.mxu0
        %v713 = vadd.f32 %v520, %v712
        %v714 = vpop.f32.mrf.mxu0
        %715 = vmatprep.mubr.f32.mxu0 0.0
        %716 = vmatmul.mubr.f32.gmra.mxu0 %v602
        %v717 = vpop.f32.mrf.mxu0
        %v718 = vadd.f32 %v525, %v717
        %v719 = vpop.f32.mrf.mxu0
        %720 = vmatprep.mubr.f32.mxu0 0.0
        %721 = vmatmul.mubr.f32.gmra.mxu0 %v605
        %v722 = vpop.f32.mrf.mxu0
        %v723 = vadd.f32 %v530, %v722
        %v724 = vpop.f32.mrf.mxu0
        %725 = vmatprep.mubr.f32.mxu0 0.0
        %726 = vmatmul.mubr.f32.gmra.mxu0 %v608
        %v727 = vpop.f32.mrf.mxu0
        %v728 = vadd.f32 %v535, %v727
        %v729 = vpop.f32.mrf.mxu0
        %730 = vmatprep.mubr.f32.mxu0 0.0
        %731 = vmatmul.mubr.f32.gmra.mxu0 %v611
        %v732 = vpop.f32.mrf.mxu0
        %v733 = vadd.f32 %v540, %v732
        %v734 = vpop.f32.mrf.mxu0
        %735 = vmatprep.mubr.f32.mxu0 0.0
        %736 = vmatmul.mubr.f32.gmra.mxu0 %v614
        %v737 = vpop.f32.mrf.mxu0
        %v738 = vadd.f32 %v545, %v737
        %v739 = vpop.f32.mrf.mxu0
        %740 = vmatprep.mubr.f32.mxu0 0.0
        %741 = vmatmul.mubr.f32.gmra.mxu0 %v617
        %v742 = vpop.f32.mrf.mxu0
        %v743 = vadd.f32 %v550, %v742
        %v744 = vpop.f32.mrf.mxu0
        %745 = vmatprep.mubr.f32.mxu0 0.0
        %746 = vmatmul.mubr.f32.gmra.mxu0 %v620
        %v747 = vpop.f32.mrf.mxu0
        %v748 = vadd.f32 %v555, %v747
        %v749 = vpop.f32.mrf.mxu0
        %750 = vmatprep.mubr.f32.mxu0 0.0
        %751 = vmatmul.mubr.f32.gmra.mxu0 %v623
        %v752 = vpop.f32.mrf.mxu0
        %v753 = vadd.f32 %v560, %v752
        %v754 = vpop.f32.mrf.mxu0
        %755 = vmatprep.mubr.f32.mxu0 0.0
        %756 = vmatmul.mubr.f32.gmra.mxu0 %v626
        %v757 = vpop.f32.mrf.mxu0
        %v758 = vadd.f32 %v565, %v757
        %v759 = vpop.f32.mrf.mxu0
        %760 = vmatprep.mubr.f32.mxu0 0.0
        %761 = vmatmul.mubr.f32.gmra.mxu0 %v629
        %v762 = vpop.f32.mrf.mxu0
        %v763 = vadd.f32 %v570, %v762
        %v764 = vpop.f32.mrf.mxu0
        %765 = vmatprep.mubr.f32.mxu0 0.0
        %766 = vmatmul.mubr.f32.gmra.mxu0 %v632
        %v767 = vpop.f32.mrf.mxu0
        %v768 = vadd.f32 %v575, %v767
        %v769 = vpop.f32.mrf.mxu0
        %770 = vmatprep.mubr.f32.mxu0 0.0
        %771 = vmatmul.mubr.f32.gmra.mxu0 %v635
        %v772 = vpop.f32.mrf.mxu0
        %v773 = vadd.f32 %v580, %v772
        %v774 = vpop.f32.mrf.mxu0
        %775 = vmatprep.mubr.f32.mxu0 0.0
        %776 = vmatmul.mubr.f32.gmra.mxu0 %v638
        %v777 = vpop.f32.mrf.mxu0
        %v778 = vadd.f32 %v585, %v777
        %v779 = vpop.f32.mrf.mxu0
        %780 = vmatprep.mubr.f32.mxu0 0.0
        %781 = vmatmul.mubr.f32.gmra.mxu0 %v641
        %v782 = vpop.f32.mrf.mxu0
        %v783 = vadd.f32 %v590, %v782
        %v784 = vpop.f32.mrf.mxu0
        %785 = vmatprep.mubr.f32.mxu0 0.0
        %786 = vmatmul.mubr.f32.gmra.mxu0 %v644
        %v787 = vpop.f32.mrf.mxu0
        %v788 = vadd.f32 %v595, %v787
        %v789 = vpop.f32.mrf.mxu0
        %790 = vdwg.mxu0
        %v791 = vmul.f32 %v713, 0.5
        %v792 = vmul.f32 %v718, 0.5
        %v793 = vmul.f32 %v723, 0.5
        %v794 = vmul.f32 %v728, 0.5
        %v795 = vmul.f32 %v733, 0.5
        %v796 = vmul.f32 %v738, 0.5
        %v797 = vmul.f32 %v743, 0.5
        %v798 = vmul.f32 %v748, 0.5
        %v799 = vmul.f32 %v753, 0.5
        %v800 = vmul.f32 %v758, 0.5
        %v801 = vmul.f32 %v763, 0.5
        %v802 = vmul.f32 %v768, 0.5
        %v803 = vmul.f32 %v773, 0.5
        %v804 = vmul.f32 %v778, 0.5
        %v805 = vmul.f32 %v783, 0.5
        %v806 = vmul.f32 %v788, 0.5
        %v807 = vmul.f32 %v713, 0.70710677
        %v808 = vmul.f32 %v718, 0.70710677
        %v809 = vmul.f32 %v723, 0.70710677
        %v810 = vmul.f32 %v728, 0.70710677
        %v811 = vmul.f32 %v733, 0.70710677
        %v812 = vmul.f32 %v738, 0.70710677
        %v813 = vmul.f32 %v743, 0.70710677
        %v814 = vmul.f32 %v748, 0.70710677
        %v815 = vmul.f32 %v753, 0.70710677
        %v816 = vmul.f32 %v758, 0.70710677
        %v817 = vmul.f32 %v763, 0.70710677
        %v818 = vmul.f32 %v768, 0.70710677
        %v819 = vmul.f32 %v773, 0.70710677
        %v820 = vmul.f32 %v778, 0.70710677
        %v821 = vmul.f32 %v783, 0.70710677
        %v822 = vmul.f32 %v788, 0.70710677
        %v823 = verf.f32.pop %v807
        %v824 = verf.f32.pop %v808
        %v825 = verf.f32.pop %v809
        %v826 = verf.f32.pop %v810
        %v827 = verf.f32.pop %v811
        %v828 = verf.f32.pop %v812
        %v829 = verf.f32.pop %v813
        %v830 = verf.f32.pop %v814
        %v831 = verf.f32.pop %v815
        %v832 = verf.f32.pop %v816
        %v833 = verf.f32.pop %v817
        %v834 = verf.f32.pop %v818
        %v835 = verf.f32.pop %v819
        %v836 = verf.f32.pop %v820
        %v837 = verf.f32.pop %v821
        %v838 = verf.f32.pop %v822
        %v839 = vadd.f32 %v823, 1.0
        %v840 = vadd.f32 %v824, 1.0
        %v841 = vadd.f32 %v825, 1.0
        %v842 = vadd.f32 %v826, 1.0
        %v843 = vadd.f32 %v827, 1.0
        %v844 = vadd.f32 %v828, 1.0
        %v845 = vadd.f32 %v829, 1.0
        %v846 = vadd.f32 %v830, 1.0
        %v847 = vadd.f32 %v831, 1.0
        %v848 = vadd.f32 %v832, 1.0
        %v849 = vadd.f32 %v833, 1.0
        %v850 = vadd.f32 %v834, 1.0
        %v851 = vadd.f32 %v835, 1.0
        %v852 = vadd.f32 %v836, 1.0
        %v853 = vadd.f32 %v837, 1.0
        %v854 = vadd.f32 %v838, 1.0
        %v855 = vmul.f32 %v791, %v839
        %v856 = vmul.f32 %v792, %v840
        %v857 = vmul.f32 %v793, %v841
        %v858 = vmul.f32 %v794, %v842
        %v859 = vmul.f32 %v795, %v843
        %v860 = vmul.f32 %v796, %v844
        %v861 = vmul.f32 %v797, %v845
        %v862 = vmul.f32 %v798, %v846
        %v863 = vmul.f32 %v799, %v847
        %v864 = vmul.f32 %v800, %v848
        %v865 = vmul.f32 %v801, %v849
        %v866 = vmul.f32 %v802, %v850
        %v867 = vmul.f32 %v803, %v851
        %v868 = vmul.f32 %v804, %v852
        %v869 = vmul.f32 %v805, %v853
        %v870 = vmul.f32 %v806, %v854
        %872 = vset.pattern.permute.xlu0 0
        %873 = vperm.xlu0 %872, %v516
        %v874 = vpop.permute.xlu0 %873
        %876 = vmatprep.subr.mxu0 0.0
        %877 = vmatpush1.msra.mxu0 %v870
        %878 = vmatprep.subr.mxu0 0.0
        %879 = vmatpush1.msra.mxu0 %v869
        %880 = vmatprep.subr.mxu0 0.0
        %881 = vmatpush1.msra.mxu0 %v868
        %882 = vmatprep.subr.mxu0 0.0
        %883 = vmatpush1.msra.mxu0 %v867
        %884 = vmatprep.subr.mxu0 0.0
        %885 = vmatpush1.msra.mxu0 %v866
        %886 = vmatprep.subr.mxu0 0.0
        %887 = vmatpush1.msra.mxu0 %v865
        %888 = vmatprep.subr.mxu0 0.0
        %889 = vmatpush1.msra.mxu0 %v864
        %890 = vmatprep.subr.mxu0 0.0
        %891 = vmatpush1.msra.mxu0 %v863
        %892 = vmatprep.subr.mxu0 0.0
        %893 = vmatpush1.msra.mxu0 %v862
        %894 = vmatprep.subr.mxu0 0.0
        %895 = vmatpush1.msra.mxu0 %v861
        %896 = vmatprep.subr.mxu0 0.0
        %897 = vmatpush1.msra.mxu0 %v860
        %898 = vmatprep.subr.mxu0 0.0
        %899 = vmatpush1.msra.mxu0 %v859
        %900 = vmatprep.subr.mxu0 0.0
        %901 = vmatpush1.msra.mxu0 %v858
        %902 = vmatprep.subr.mxu0 0.0
        %903 = vmatpush1.msra.mxu0 %v857
        %904 = vmatprep.subr.mxu0 0.0
        %905 = vmatpush1.msra.mxu0 %v856
        %906 = vmatprep.subr.mxu0 0.0
        %907 = vmatpush1.msra.mxu0 %v855
        %908 = vmatprep.subr.mxu0 0.0
        %909 = vmatpush2.msra.mxu0 0.0
        %910 = vmatprep.subr.mxu0 0.0
        %911 = vmatpush2.msra.mxu0 0.0
        %912 = vmatprep.subr.mxu0 0.0
        %913 = vmatpush2.msra.mxu0 0.0
        %914 = vmatprep.subr.mxu0 0.0
        %915 = vmatpush2.msra.mxu0 0.0
        %916 = vmatprep.subr.mxu0 0.0
        %917 = vmatpush2.msra.mxu0 0.0
        %918 = vmatprep.subr.mxu0 0.0
        %919 = vmatpush2.msra.mxu0 0.0
        %920 = vmatprep.subr.mxu0 0.0
        %921 = vmatpush2.msra.mxu0 0.0
        %922 = vmatprep.subr.mxu0 0.0
        %923 = vmatpush2.msra.mxu0 0.0
        %924 = vmatprep.subr.mxu0 0.0
        %925 = vmatpush2.msra.mxu0 0.0
        %926 = vmatprep.subr.mxu0 0.0
        %927 = vmatpush2.msra.mxu0 0.0
        %928 = vmatprep.subr.mxu0 0.0
        %929 = vmatpush2.msra.mxu0 0.0
        %930 = vmatprep.subr.mxu0 0.0
        %931 = vmatpush2.msra.mxu0 0.0
        %932 = vmatprep.subr.mxu0 0.0
        %933 = vmatpush2.msra.mxu0 0.0
        %934 = vmatprep.subr.mxu0 0.0
        %935 = vmatpush2.msra.mxu0 0.0
        %936 = vmatprep.subr.mxu0 0.0
        %937 = vmatpush2.msra.mxu0 0.0
        %938 = vmatprep.subr.mxu0 0.0
        %939 = vmatpush2.msra.mxu0 0.0
        %940 = vmatprep.mubr.f32.mxu0 0.0
        %941 = vmatmul.mubr.f32.gmra.mxu0 %v515
        %v942 = vpop.f32.mrf.mxu0
        %v943 = vadd.f32 %v874, %v942
        %v944 = vpop.f32.mrf.mxu0
        %945 = vdwg.mxu0
        %v946 = vadd.f32 %v449, %v943
        %947 = vst [vmem:[#allocation2] sm:$0xff] %v946
        %v948 = vld [vmem:[#allocation2] sm:$0xff]
        %v949 = vld [vmem:[%s7] sm:$0x1]
        %v950 = vld [vmem:[%s8] sm:$0x1]
        %v951 = vsel %vm460, %v948, 0.0
        %952 = vadd.xlane.f32.xlu0 %v951
        %v953 = vpop.xlane.xlu0 %952
        %v954 = vmul.f32 %v953, 0.03125
        %v955 = vsub.f32 %v948, %v954
        %v956 = vsel %vm460, %v955, 0.0
        %v957 = vmul.f32 %v956, %v956
        %958 = vadd.xlane.f32.xlu0 %v957
        %v959 = vpop.xlane.xlu0 %958
        %v960 = vmul.f32 %v959, 0.03125
        %v961 = vadd.f32 %v960, 1e-05
        %v962 = vrsqrt.pop %v961
        %v963 = vmul.f32 %v956, %v962
        %v965 = vlaneseq
        %v966 = vshrl.u32 %v965, 7
        %v967 = vsub.s32 0, %v966
        %v968 = vrot.slane %v949, %v967
        %v970 = vmul.f32 %v963, %v968
        %v972 = vlaneseq
        %v973 = vshrl.u32 %v972, 7
        %v974 = vsub.s32 0, %v973
        %v975 = vrot.slane %v950, %v974
        %v977 = vadd.f32 %v970, %v975
        %v978 = vld [vmem:[%s9] sm:$0xff]
        %v979 = vld [vmem:[%s9 + $0x8] sm:$0xff]
        %v980 = vld [vmem:[%s9 + $0x10] sm:$0xff]
        %v981 = vld [vmem:[%s9 + $0x18] sm:$0xff]
        %v982 = vld [vmem:[%s9 + $0x20] sm:$0xff]
        %v983 = vld [vmem:[%s9 + $0x28] sm:$0xff]
        %v984 = vld [vmem:[%s9 + $0x30] sm:$0xff]
        %v985 = vld [vmem:[%s9 + $0x38] sm:$0xff]
        %v986 = vld [vmem:[%s9 + $0x40] sm:$0xff]
        %v987 = vld [vmem:[%s9 + $0x48] sm:$0xff]
        %v988 = vld [vmem:[%s9 + $0x50] sm:$0xff]
        %v989 = vld [vmem:[%s9 + $0x58] sm:$0xff]
        %v990 = vld [vmem:[%s9 + $0x60] sm:$0xff]
        %v991 = vld [vmem:[%s9 + $0x68] sm:$0xff]
        %v992 = vld [vmem:[%s9 + $0x70] sm:$0xff]
        %v993 = vld [vmem:[%s9 + $0x78] sm:$0xff]
        %v994 = vld [vmem:[%s10] sm:$0x1]
        %v996 = vlaneseq
        %v997 = vshrl.u32 %v996, 7
        %v998 = vsub.s32 0, %v997
        %v999 = vrot.slane %v994, %v998
        %1001 = vmatprep.subr.mxu0 0.0
        %1002 = vmatpush1.msra.mxu0 %v993
        %1003 = vmatprep.subr.mxu0 0.0
        %1004 = vmatpush1.msra.mxu0 %v992
        %1005 = vmatprep.subr.mxu0 0.0
        %1006 = vmatpush1.msra.mxu0 %v991
        %1007 = vmatprep.subr.mxu0 0.0
        %1008 = vmatpush1.msra.mxu0 %v990
        %1009 = vmatprep.subr.mxu0 0.0
        %1010 = vmatpush1.msra.mxu0 %v989
        %1011 = vmatprep.subr.mxu0 0.0
        %1012 = vmatpush1.msra.mxu0 %v988
        %1013 = vmatprep.subr.mxu0 0.0
        %1014 = vmatpush1.msra.mxu0 %v987
        %1015 = vmatprep.subr.mxu0 0.0
        %1016 = vmatpush1.msra.mxu0 %v986
        %1017 = vmatprep.subr.mxu0 0.0
        %1018 = vmatpush1.msra.mxu0 %v985
        %1019 = vmatprep.subr.mxu0 0.0
        %1020 = vmatpush1.msra.mxu0 %v984
        %1021 = vmatprep.subr.mxu0 0.0
        %1022 = vmatpush1.msra.mxu0 %v983
        %1023 = vmatprep.subr.mxu0 0.0
        %1024 = vmatpush1.msra.mxu0 %v982
        %1025 = vmatprep.subr.mxu0 0.0
        %1026 = vmatpush1.msra.mxu0 %v981
        %1027 = vmatprep.subr.mxu0 0.0
        %1028 = vmatpush1.msra.mxu0 %v980
        %1029 = vmatprep.subr.mxu0 0.0
        %1030 = vmatpush1.msra.mxu0 %v979
        %1031 = vmatprep.subr.mxu0 0.0
        %1032 = vmatpush1.msra.mxu0 %v978
        %1033 = vmatprep.subr.mxu0 0.0
        %1034 = vmatpush2.msra.mxu0 0.0
        %1035 = vmatprep.subr.mxu0 0.0
        %1036 = vmatpush2.msra.mxu0 0.0
        %1037 = vmatprep.subr.mxu0 0.0
        %1038 = vmatpush2.msra.mxu0 0.0
        %1039 = vmatprep.subr.mxu0 0.0
        %1040 = vmatpush2.msra.mxu0 0.0
        %1041 = vmatprep.subr.mxu0 0.0
        %1042 = vmatpush2.msra.mxu0 0.0
        %1043 = vmatprep.subr.mxu0 0.0
        %1044 = vmatpush2.msra.mxu0 0.0
        %1045 = vmatprep.subr.mxu0 0.0
        %1046 = vmatpush2.msra.mxu0 0.0
        %1047 = vmatprep.subr.mxu0 0.0
        %1048 = vmatpush2.msra.mxu0 0.0
        %1049 = vmatprep.subr.mxu0 0.0
        %1050 = vmatpush2.msra.mxu0 0.0
        %1051 = vmatprep.subr.mxu0 0.0
        %1052 = vmatpush2.msra.mxu0 0.0
        %1053 = vmatprep.subr.mxu0 0.0
        %1054 = vmatpush2.msra.mxu0 0.0
        %1055 = vmatprep.subr.mxu0 0.0
        %1056 = vmatpush2.msra.mxu0 0.0
        %1057 = vmatprep.subr.mxu0 0.0
        %1058 = vmatpush2.msra.mxu0 0.0
        %1059 = vmatprep.subr.mxu0 0.0
        %1060 = vmatpush2.msra.mxu0 0.0
        %1061 = vmatprep.subr.mxu0 0.0
        %1062 = vmatpush2.msra.mxu0 0.0
        %1063 = vmatprep.subr.mxu0 0.0
        %1064 = vmatpush2.msra.mxu0 0.0
        %1065 = vmatprep.mubr.f32.mxu0 0.0
        %1066 = vmatmul.mubr.f32.gmra.mxu0 %v977
        %v1067 = vpop.f32.mrf.mxu0
        %v1068 = vadd.f32 %v999, %v1067
        %v1069 = vpop.f32.mrf.mxu0
        %1070 = vdwg.mxu0
        %v1071 = vmul.f32 %v1068, 0.5
        %v1072 = vmul.f32 %v1068, 0.70710677
        %v1073 = verf.f32.pop %v1072
        %v1074 = vadd.f32 %v1073, 1.0
        %v1075 = vmul.f32 %v1071, %v1074
        %v1076 = vld [vmem:[%s11] sm:$0xff]
        %v1077 = vld [vmem:[%s11 + $0x8] sm:$0xff]
        %v1078 = vld [vmem:[%s11 + $0x10] sm:$0xff]
        %v1079 = vld [vmem:[%s11 + $0x18] sm:$0xff]
        %v1080 = vld [vmem:[%s11 + $0x20] sm:$0xff]
        %v1081 = vld [vmem:[%s11 + $0x28] sm:$0xff]
        %v1082 = vld [vmem:[%s11 + $0x30] sm:$0xff]
        %v1083 = vld [vmem:[%s11 + $0x38] sm:$0xff]
        %v1084 = vld [vmem:[%s11 + $0x40] sm:$0xff]
        %v1085 = vld [vmem:[%s11 + $0x48] sm:$0xff]
        %v1086 = vld [vmem:[%s11 + $0x50] sm:$0xff]
        %v1087 = vld [vmem:[%s11 + $0x58] sm:$0xff]
        %v1088 = vld [vmem:[%s11 + $0x60] sm:$0xff]
        %v1089 = vld [vmem:[%s11 + $0x68] sm:$0xff]
        %v1090 = vld [vmem:[%s11 + $0x70] sm:$0xff]
        %v1091 = vld [vmem:[%s11 + $0x78] sm:$0xff]
        %v1092 = vld [vmem:[%s12] sm:$0x1]
        %v1094 = vlaneseq
        %v1095 = vshrl.u32 %v1094, 7
        %v1096 = vsub.s32 0, %v1095
        %v1097 = vrot.slane %v1092, %v1096
        %1099 = vmatprep.subr.mxu0 0.0
        %1100 = vmatpush1.msra.mxu0 %v1091
        %1101 = vmatprep.subr.mxu0 0.0
        %1102 = vmatpush1.msra.mxu0 %v1090
        %1103 = vmatprep.subr.mxu0 0.0
        %1104 = vmatpush1.msra.mxu0 %v1089
        %1105 = vmatprep.subr.mxu0 0.0
        %1106 = vmatpush1.msra.mxu0 %v1088
        %1107 = vmatprep.subr.mxu0 0.0
        %1108 = vmatpush1.msra.mxu0 %v1087
        %1109 = vmatprep.subr.mxu0 0.0
        %1110 = vmatpush1.msra.mxu0 %v1086
        %1111 = vmatprep.subr.mxu0 0.0
        %1112 = vmatpush1.msra.mxu0 %v1085
        %1113 = vmatprep.subr.mxu0 0.0
        %1114 = vmatpush1.msra.mxu0 %v1084
        %1115 = vmatprep.subr.mxu0 0.0
        %1116 = vmatpush1.msra.mxu0 %v1083
        %1117 = vmatprep.subr.mxu0 0.0
        %1118 = vmatpush1.msra.mxu0 %v1082
        %1119 = vmatprep.subr.mxu0 0.0
        %1120 = vmatpush1.msra.mxu0 %v1081
        %1121 = vmatprep.subr.mxu0 0.0
        %1122 = vmatpush1.msra.mxu0 %v1080
        %1123 = vmatprep.subr.mxu0 0.0
        %1124 = vmatpush1.msra.mxu0 %v1079
        %1125 = vmatprep.subr.mxu0 0.0
        %1126 = vmatpush1.msra.mxu0 %v1078
        %1127 = vmatprep.subr.mxu0 0.0
        %1128 = vmatpush1.msra.mxu0 %v1077
        %1129 = vmatprep.subr.mxu0 0.0
        %1130 = vmatpush1.msra.mxu0 %v1076
        %1131 = vmatprep.subr.mxu0 0.0
        %1132 = vmatpush2.msra.mxu0 0.0
        %1133 = vmatprep.subr.mxu0 0.0
        %1134 = vmatpush2.msra.mxu0 0.0
        %1135 = vmatprep.subr.mxu0 0.0
        %1136 = vmatpush2.msra.mxu0 0.0
        %1137 = vmatprep.subr.mxu0 0.0
        %1138 = vmatpush2.msra.mxu0 0.0
        %1139 = vmatprep.subr.mxu0 0.0
        %1140 = vmatpush2.msra.mxu0 0.0
        %1141 = vmatprep.subr.mxu0 0.0
        %1142 = vmatpush2.msra.mxu0 0.0
        %1143 = vmatprep.subr.mxu0 0.0
        %1144 = vmatpush2.msra.mxu0 0.0
        %1145 = vmatprep.subr.mxu0 0.0
        %1146 = vmatpush2.msra.mxu0 0.0
        %1147 = vmatprep.subr.mxu0 0.0
        %1148 = vmatpush2.msra.mxu0 0.0
        %1149 = vmatprep.subr.mxu0 0.0
        %1150 = vmatpush2.msra.mxu0 0.0
        %1151 = vmatprep.subr.mxu0 0.0
        %1152 = vmatpush2.msra.mxu0 0.0
        %1153 = vmatprep.subr.mxu0 0.0
        %1154 = vmatpush2.msra.mxu0 0.0
        %1155 = vmatprep.subr.mxu0 0.0
        %1156 = vmatpush2.msra.mxu0 0.0
        %1157 = vmatprep.subr.mxu0 0.0
        %1158 = vmatpush2.msra.mxu0 0.0
        %1159 = vmatprep.subr.mxu0 0.0
        %1160 = vmatpush2.msra.mxu0 0.0
        %1161 = vmatprep.subr.mxu0 0.0
        %1162 = vmatpush2.msra.mxu0 0.0
        %1163 = vmatprep.mubr.f32.mxu0 0.0
        %1164 = vmatmul.mubr.f32.gmra.mxu0 %v1075
        %v1165 = vpop.f32.mrf.mxu0
        %v1166 = vadd.f32 %v1097, %v1165
        %v1167 = vpop.f32.mrf.mxu0
        %1168 = vdwg.mxu0
        %v1169 = vadd.f32 %v948, %v1166
        %1170 = vst [vmem:[%s444] sm:$0xff] %v1169
        %s1171 = sand.u32 %s314, 1
        %s1172 = scalar_lea.sflag [#allocation5], %s1171
        %s1173 = sand.u32 %s314, 1
        %s1174 = smul.addr %s1173, 8
        %s1175 = scalar_lea.vmem [#allocation6], %s1174
        // Predicated region
        $region77: #{tpu_custom_call.1} parent=71 // pred_check
          %p1176 = pneg %p324
        $region78: #{tpu_custom_call.1} parent=71 // pred_check_branch
          %1178 = sbr.rel (%p1176) target = $region80
        $region79: #{tpu_custom_call.1} parent=71 // pred_region
          %s1180 = ssub.s32 128, 128
          %1181 = vsyncadd %s1172, %s1180
          %s1182 = smul.addr %s28, 128
          %s1183 = scalar_lea.hbm %s13, %s1182
          %s1185 = sshll.u32 %s1175, 4
          %s1186 = int_to_ptr.vmem [resolvable:$true] %s1185
          %1188 = dma.vmem_to_hbm [thread:$0]  %s1186, 128, %s1183, %s1172
        $region80: #{tpu_custom_call.1} parent=71 // pred_fallthru
          _
      $region72: #{tpu_custom_call.1} parent=5 // pred_fallthru
        _
      %p1189 = scmp.le.s32.totalorder 2, %s23
      // Predicated region
      $region81: #{tpu_custom_call.1} parent=5 // pred_check
        %p1190 = pneg %p1189
      $region82: #{tpu_custom_call.1} parent=5 // pred_check_branch
        %1192 = sbr.rel (%p1190) target = $region84
      $region83: #{tpu_custom_call.1} parent=5 // pred_region
        %s1193 = ssub.s32 %s23, 2
        // Predicated region
        $region85: #{tpu_custom_call.1} parent=83 // pred_check
          %p1194 = pneg %p330
        $region86: #{tpu_custom_call.1} parent=83 // pred_check_branch
          %1196 = sbr.rel (%p1194) target = $region88
        $region87: #{tpu_custom_call.1} parent=83 // pred_region
          %s1197 = sand.u32 %s315, 1
          %s1198 = scalar_lea.sflag [#allocation5], %s1197
          %s1199 = sand.u32 %s315, 1
          %s1200 = smul.addr %s1199, 8
          %s1201 = scalar_lea.vmem [#allocation6], %s1200
          %1202 = dma.done %s1198, 128
        $region88: #{tpu_custom_call.1} parent=83 // pred_fallthru
          _
      $region84: #{tpu_custom_call.1} parent=5 // pred_fallthru
        _
    $region6: #{tpu_custom_call.1} parent=1 // loop_footer
      %s27 = sadd.s32 1, %s23
    $region7: #{tpu_custom_call.1} parent=1 // loop_footer_branch
      %22 = sbr.rel target = $region3
    $region8: #{tpu_custom_call.1} parent=1 // loop_exit
      _
    %1203 = vsyncpa [#allocation4], 1
    %s1204 = scalar_lea.sflag [#allocation4], 1
    %1205 = vsyncpa %s1204, 1
    %1206 = vsyncpa [#allocation5], 1
    %s1207 = scalar_lea.sflag [#allocation5], 1
    %1208 = vsyncpa %s1207, 1

</llo_original>
